<compile_context>
chip_gen: v5e
topology: v5e:2x2
jax: 0.10.0
libtpu: 0.0.40
codegen_flags: <defaults>
</compile_context>

<pallas_src>
import functools

import jax
import jax.numpy as jnp
import numpy as np
from jax.experimental import pallas as pl
from jax.experimental.pallas import tpu as pltpu


# ----------------------------- in-kernel math helpers -----------------------------

_LN_EPS = 1e-6   # matches partial(nn.LayerNorm, eps=1e-06) in the PyTorch spec


def _layernorm(v, gamma, beta, eps=_LN_EPS):
    mu = jnp.mean(v, axis=-1, keepdims=True)
    c = v - mu
    var = jnp.mean(c * c, axis=-1, keepdims=True)
    return c * jax.lax.rsqrt(var + eps) * gamma + beta


def _gelu_tanh(x):
    # tanh-approximation GELU: tanh lowers to the EUP (free slot on v6e/v7x) vs a
    # ~10-VALU-op rational erf on the largest (N, hidden) intermediate.
    c = 0.7978845608028654  # sqrt(2/pi)
    return 0.5 * x * (1.0 + jnp.tanh(c * (x + 0.044715 * (x * x * x))))


# ----------------------------- fused transformer kernel ---------------------------


def _fused_kernel(x_ref,
                  ln1g_ref, ln1b_ref,
                  qw_ref, qb_ref, kw_ref, kb_ref, vw_ref, vb_ref,
                  pw_ref, pb_ref,
                  ln2g_ref, ln2b_ref,
                  f1w_ref, f1b_ref, f2w_ref, f2b_ref,
                  o_ref, attn_ref, *, num_heads):
    layer = pl.program_id(1)

    # First layer step for this batch block: seed the resident activation tile.
    @pl.when(layer == 0)
    def _():
        o_ref[...] = x_ref[...]

    bb, N, D = o_ref.shape
    dh = D // num_heads
    scale = float(dh) ** -0.5
    M = bb * N

    x = o_ref[...].reshape(M, D)               # f32 tokens, VMEM-resident across layers

    # ---- attention branch: x + Proj(MHSA(LN1(x))) ----
    xn = _layernorm(x, ln1g_ref[0], ln1b_ref[0]).astype(jnp.bfloat16)
    q = (jnp.dot(xn, qw_ref[0], preferred_element_type=jnp.float32) + qb_ref[0]
         ).reshape(bb, N, D).astype(jnp.bfloat16)
    k = (jnp.dot(xn, kw_ref[0], preferred_element_type=jnp.float32) + kb_ref[0]
         ).reshape(bb, N, D).astype(jnp.bfloat16)
    v = (jnp.dot(xn, vw_ref[0], preferred_element_type=jnp.float32) + vb_ref[0]
         ).reshape(bb, N, D).astype(jnp.bfloat16)

    # Heads live in the lane dimension; static unroll (num_heads is small & static).
    # Each head's output is stored into its column slice of the scratch buffer so a
    # single full-K projection matmul follows (no per-head K=dh matmuls, no VALU adds).
    for h in range(num_heads):
        lo = h * dh
        qh = q[:, :, lo:lo + dh]
        kh = k[:, :, lo:lo + dh]
        vh = v[:, :, lo:lo + dh]
        s = jnp.einsum("bqd,bkd->bqk", qh, kh,
                       preferred_element_type=jnp.float32) * scale
        s = s - jnp.max(s, axis=-1, keepdims=True)
        p = jnp.exp(s)
        p = p * pl.reciprocal(jnp.sum(p, axis=-1, keepdims=True), approx=True)
        ho = jnp.einsum("bqk,bkd->bqd", p.astype(jnp.bfloat16), vh,
                        preferred_element_type=jnp.float32)
        attn_ref[:, :, lo:lo + dh] = ho.astype(jnp.bfloat16)

    attn = attn_ref[...].reshape(M, D)
    x = x + jnp.dot(attn, pw_ref[0], preferred_element_type=jnp.float32) + pb_ref[0]

    # ---- MLP branch: x + FC2(GELU(FC1(LN2(x)))) ----
    xn2 = _layernorm(x, ln2g_ref[0], ln2b_ref[0]).astype(jnp.bfloat16)
    h1 = jnp.dot(xn2, f1w_ref[0], preferred_element_type=jnp.float32) + f1b_ref[0]
    h1 = _gelu_tanh(h1).astype(jnp.bfloat16)
    h2 = jnp.dot(h1, f2w_ref[0], preferred_element_type=jnp.float32) + f2b_ref[0]

    o_ref[...] = (x + h2).reshape(bb, N, D)     # stays resident until the layer axis ends


def transformer_pallas(seq, params, num_heads, *, batch_block=None):
    """seq: (B, N, D) f32. params: list (len=depth) of per-block parameter dicts."""
    B, N, D = seq.shape
    depth = len(params)
    hidden = params[0]["fc1_w"].shape[1]
    assert D % num_heads == 0

    if batch_block is None:
        # Amortize per-layer weight DMA over several batch items while keeping >=2
        # batch grid steps so both v7x TensorCores get work under "parallel".
        batch_block = B if B == 1 else max(1, B // 2)
    assert B % batch_block == 0, "batch must be divisible by batch_block"
    bb = batch_block

    def stack(name, dtype):
        return jnp.stack([blk[name] for blk in params], axis=0).astype(dtype)

    def split_qkv(name, j, dtype):
        # Split fused qkv into three D-aligned projections (bounds the (N, 3D) qkv
        # intermediate's lifetime in-kernel and keeps lane slicing aligned).
        return jnp.stack([blk[name][..., j * D:(j + 1) * D] for blk in params],
                         axis=0).astype(dtype)

    # Matmul weights in bf16 (halves weight HBM/VMEM traffic, bf16-native MXU);
    # LN params and biases stay f32 (added after the f32 accumulation).
    weights = [
        stack("ln1_g", jnp.float32), stack("ln1_b", jnp.float32),
        split_qkv("qkv_w", 0, jnp.bfloat16), split_qkv("qkv_b", 0, jnp.float32),
        split_qkv("qkv_w", 1, jnp.bfloat16), split_qkv("qkv_b", 1, jnp.float32),
        split_qkv("qkv_w", 2, jnp.bfloat16), split_qkv("qkv_b", 2, jnp.float32),
        stack("proj_w", jnp.bfloat16), stack("proj_b", jnp.float32),
        stack("ln2_g", jnp.float32), stack("ln2_b", jnp.float32),
        stack("fc1_w", jnp.bfloat16), stack("fc1_b", jnp.float32),
        stack("fc2_w", jnp.bfloat16), stack("fc2_b", jnp.float32),
    ]

    in_specs = [pl.BlockSpec((bb, N, D), lambda b, l: (b, 0, 0))]
    for w in weights:
        in_specs.append(pl.BlockSpec((1,) + w.shape[1:], lambda b, l: (l, 0, 0)))

    # Explicit VMEM budget from the actual block sizes (double-buffered activations &
    # weights + scratch + generous headroom for compiler temporaries), capped to v7x's
    # 64 MiB physical VMEM.  At production sizes (D=768, H=3072) tile fc1/fc2 along the
    # hidden dim with an extra grid axis if this estimate exceeds the cap.
    act_bytes = bb * N * D * 4
    layer_w_bytes = sum(int(np.prod(w.shape[1:])) * w.dtype.itemsize for w in weights)
    tmp_bytes = bb * N * (4 * D + 2 * hidden) * 4
    est = 4 * act_bytes + 2 * layer_w_bytes + bb * N * D * 2 + 4 * tmp_bytes + (4 << 20)
    vmem_limit = int(min(64 << 20, max(32 << 20, est)))

    return pl.pallas_call(
        functools.partial(_fused_kernel, num_heads=num_heads),
        out_shape=jax.ShapeDtypeStruct((B, N, D), jnp.float32),
        grid_spec=pltpu.PrefetchScalarGridSpec(
            num_scalar_prefetch=0,
            grid=(B // bb, depth),
            in_specs=in_specs,
            # Same output block across the layer axis -> the activation tile is the
            # accumulator, written back to HBM only once per batch block.
            out_specs=pl.BlockSpec((bb, N, D), lambda b, l: (b, 0, 0)),
            scratch_shapes=[pltpu.VMEM((bb, N, D), jnp.bfloat16)]),
        # Single HBM buffer for the activations: input tokens are read once at layer 0
        # and the result overwrites them after the last layer.
        input_output_aliases={0: 0},
        compiler_params=pltpu.CompilerParams(
            dimension_semantics=("parallel", "arbitrary"),
            vmem_limit_bytes=vmem_limit),
    )(seq, *weights)


# ----------------------------- module wrapper (glue) ------------------------------


def transformer_forward(x, params, num_heads, *, batch_block=None):
    """x: (B, C, H, W) with C == base_dim * heads."""
    B, C, H, W = x.shape
    # rearrange 'b c h w -> b (h w) c'
    seq = jnp.transpose(x, (0, 2, 3, 1)).reshape(B, H * W, C).astype(jnp.float32)
    seq = transformer_pallas(seq, params, num_heads, batch_block=batch_block)
    # rearrange 'b (h w) c -> b c h w'
    return jnp.transpose(seq.reshape(B, H, W, C), (0, 3, 1, 2))


def init_params(key, depth, dim, heads, mlp_ratio):
    hidden = int(dim * mlp_ratio)
    params = []
    for _ in range(depth):
        key, k0, k1, k2, k3, k4, k5 = jax.random.split(key, 7)
        params.append(dict(
            ln1_g=jnp.ones((1, dim), jnp.float32),
            ln1_b=jnp.zeros((1, dim), jnp.float32),
            qkv_w=0.02 * jax.random.normal(k0, (dim, 3 * dim), jnp.float32),
            qkv_b=0.01 * jax.random.normal(k1, (1, 3 * dim), jnp.float32),
            proj_w=0.02 * jax.random.normal(k2, (dim, dim), jnp.float32),
            proj_b=0.01 * jax.random.normal(k3, (1, dim), jnp.float32),
            ln2_g=jnp.ones((1, dim), jnp.float32),
            ln2_b=jnp.zeros((1, dim), jnp.float32),
            fc1_w=0.02 * jax.random.normal(k4, (dim, hidden), jnp.float32),
            fc1_b=jnp.zeros((1, hidden), jnp.float32),
            fc2_w=0.02 * jax.random.normal(k5, (hidden, dim), jnp.float32),
            fc2_b=jnp.zeros((1, dim), jnp.float32),
        ))
    return params


# ----------------------------- pure-JAX reference (sanity check) ------------------


def _reference_forward(x, params, num_heads):
    B, C, H, W = x.shape
    seq = jnp.transpose(x, (0, 2, 3, 1)).reshape(B, H * W, C).astype(jnp.float32)
    dh = C // num_heads
    for blk in params:
        xn = _layernorm(seq, blk["ln1_g"], blk["ln1_b"])
        qkv = xn @ blk["qkv_w"] + blk["qkv_b"]
        q, k, v = jnp.split(qkv, 3, axis=-1)
        q = q.reshape(B, -1, num_heads, dh).transpose(0, 2, 1, 3)
        k = k.reshape(B, -1, num_heads, dh).transpose(0, 2, 1, 3)
        v = v.reshape(B, -1, num_heads, dh).transpose(0, 2, 1, 3)
        att = jnp.einsum("bhnd,bhmd->bhnm", q, k) * (dh ** -0.5)
        att = jax.nn.softmax(att, axis=-1)
        o = jnp.einsum("bhnm,bhmd->bhnd", att, v).transpose(0, 2, 1, 3).reshape(B, -1, C)
        seq = seq + (o @ blk["proj_w"] + blk["proj_b"])
        xn2 = _layernorm(seq, blk["ln2_g"], blk["ln2_b"])
        h1 = jax.nn.gelu(xn2 @ blk["fc1_w"] + blk["fc1_b"], approximate=False)
        seq = seq + (h1 @ blk["fc2_w"] + blk["fc2_b"])
    return jnp.transpose(seq.reshape(B, H, W, C), (0, 3, 1, 2))


# ----------------------------- main ------------------------------------------------

if __name__ == "__main__":
    base_dim, depth, heads, mlp_ratio = 8, 2, 4, 4.0
    embed_dim = base_dim * heads          # 32 (== input channel count)
    B, H, W = 4, 4, 4                     # seq length N = 16; batch blocked as 2 x 2

    key = jax.random.PRNGKey(0)
    kx, kp = jax.random.split(key)
    x = jax.random.normal(kx, (B, embed_dim, H, W), jnp.float32)
    params = init_params(kp, depth, embed_dim, heads, mlp_ratio)

    out = transformer_forward(x, params, heads)
    out = jax.block_until_ready(out)
    assert out.shape == x.shape and out.dtype == jnp.float32

    ref = jax.block_until_ready(_reference_forward(x, params, heads))
    # bf16 matmul operands + tanh-GELU + approx reciprocal => bf16-level tolerance
    # against the exact-erf f32 reference.
    np.testing.assert_allclose(np.asarray(out), np.asarray(ref), atol=2e-2, rtol=2e-2)

    print("KERNEL_OK")
</pallas_src>

<mosaic_0001>
module attributes {stable_mosaic.version = 11 : i64} {
  func.func @_fused_kernel(%arg0: i32, %arg1: i32, %arg2: memref<2x16x32xf32, #tpu.memory_space<vmem>>, %arg3: memref<1x1x32xf32, #tpu.memory_space<vmem>>, %arg4: memref<1x1x32xf32, #tpu.memory_space<vmem>>, %arg5: memref<1x32x32xbf16, #tpu.memory_space<vmem>>, %arg6: memref<1x1x32xf32, #tpu.memory_space<vmem>>, %arg7: memref<1x32x32xbf16, #tpu.memory_space<vmem>>, %arg8: memref<1x1x32xf32, #tpu.memory_space<vmem>>, %arg9: memref<1x32x32xbf16, #tpu.memory_space<vmem>>, %arg10: memref<1x1x32xf32, #tpu.memory_space<vmem>>, %arg11: memref<1x32x32xbf16, #tpu.memory_space<vmem>>, %arg12: memref<1x1x32xf32, #tpu.memory_space<vmem>>, %arg13: memref<1x1x32xf32, #tpu.memory_space<vmem>>, %arg14: memref<1x1x32xf32, #tpu.memory_space<vmem>>, %arg15: memref<1x32x128xbf16, #tpu.memory_space<vmem>>, %arg16: memref<1x1x128xf32, #tpu.memory_space<vmem>>, %arg17: memref<1x128x32xbf16, #tpu.memory_space<vmem>>, %arg18: memref<1x1x32xf32, #tpu.memory_space<vmem>>, %arg19: memref<2x16x32xf32, #tpu.memory_space<vmem>>, %arg20: memref<2x16x32xbf16, #tpu.memory_space<vmem>>) attributes {dimension_semantics = [#tpu.dimension_semantics<parallel>, #tpu.dimension_semantics<arbitrary>], iteration_bounds = array<i64: 2, 2>, scalar_prefetch = 0 : i64, scratch_operands = 1 : i64, tpu.core_type = #tpu.core_type<tc>, window_params = [{transform_indices = @transform_0, window_bounds = array<i64: 2, 16, 32>}, {transform_indices = @transform_1, window_bounds = array<i64: 1, 1, 32>}, {transform_indices = @transform_2, window_bounds = array<i64: 1, 1, 32>}, {transform_indices = @transform_3, window_bounds = array<i64: 1, 32, 32>}, {transform_indices = @transform_4, window_bounds = array<i64: 1, 1, 32>}, {transform_indices = @transform_5, window_bounds = array<i64: 1, 32, 32>}, {transform_indices = @transform_6, window_bounds = array<i64: 1, 1, 32>}, {transform_indices = @transform_7, window_bounds = array<i64: 1, 32, 32>}, {transform_indices = @transform_8, window_bounds = array<i64: 1, 1, 32>}, {transform_indices = @transform_9, window_bounds = array<i64: 1, 32, 32>}, {transform_indices = @transform_10, window_bounds = array<i64: 1, 1, 32>}, {transform_indices = @transform_11, window_bounds = array<i64: 1, 1, 32>}, {transform_indices = @transform_12, window_bounds = array<i64: 1, 1, 32>}, {transform_indices = @transform_13, window_bounds = array<i64: 1, 32, 128>}, {transform_indices = @transform_14, window_bounds = array<i64: 1, 1, 128>}, {transform_indices = @transform_15, window_bounds = array<i64: 1, 128, 32>}, {transform_indices = @transform_16, window_bounds = array<i64: 1, 1, 32>}, {transform_indices = @transform_17, window_bounds = array<i64: 2, 16, 32>}]} {
    %c0_i32 = arith.constant 0 : i32
    %0 = arith.cmpi eq, %arg1, %c0_i32 : i32
    %1 = arith.extui %0 : i1 to i32
    %c0_i32_0 = arith.constant 0 : i32
    %2 = arith.cmpi ne, %1, %c0_i32_0 : i32
    scf.if %2 {
      %c0_105 = arith.constant 0 : index
      %c0_106 = arith.constant 0 : index
      %c0_107 = arith.constant 0 : index
      %203 = vector.load %arg2[%c0_105, %c0_106, %c0_107] : memref<2x16x32xf32, #tpu.memory_space<vmem>>, vector<2x16x32xf32>
      %c0_108 = arith.constant 0 : index
      %c0_109 = arith.constant 0 : index
      %c0_110 = arith.constant 0 : index
      %204 = vector.load %arg19[%c0_108, %c0_109, %c0_110] : memref<2x16x32xf32, #tpu.memory_space<vmem>>, vector<2x16x32xf32>
      tpu.vector_store %arg19[%c0_108, %c0_109, %c0_110], %203 {strides = array<i32>} : memref<2x16x32xf32, #tpu.memory_space<vmem>>, vector<2x16x32xf32>,
    } else {
    }
    %c0 = arith.constant 0 : index
    %c0_1 = arith.constant 0 : index
    %c0_2 = arith.constant 0 : index
    %3 = vector.load %arg19[%c0, %c0_1, %c0_2] : memref<2x16x32xf32, #tpu.memory_space<vmem>>, vector<2x16x32xf32>
    %4 = vector.shape_cast %3 : vector<2x16x32xf32> to vector<32x32xf32>
    %c0_3 = arith.constant 0 : index
    %c0_4 = arith.constant 0 : index
    %c0_5 = arith.constant 0 : index
    %5 = vector.load %arg3[%c0_3, %c0_4, %c0_5] : memref<1x1x32xf32, #tpu.memory_space<vmem>>, vector<1x1x32xf32>
    %6 = vector.shape_cast %5 : vector<1x1x32xf32> to vector<1x32xf32>
    %c0_6 = arith.constant 0 : index
    %c0_7 = arith.constant 0 : index
    %c0_8 = arith.constant 0 : index
    %7 = vector.load %arg4[%c0_6, %c0_7, %c0_8] : memref<1x1x32xf32, #tpu.memory_space<vmem>>, vector<1x1x32xf32>
    %8 = vector.shape_cast %7 : vector<1x1x32xf32> to vector<1x32xf32>
    %cst = arith.constant dense<0.000000e+00> : vector<32xf32>
    %9 = vector.multi_reduction <add>, %4, %cst [1] : vector<32x32xf32> to vector<32xf32>
    %10 = vector.shape_cast %9 : vector<32xf32> to vector<32x1xf32>
    %cst_9 = arith.constant 3.200000e+01 : f32
    %11 = vector.broadcast %cst_9 : f32 to vector<32x1xf32>
    %12 = arith.divf %10, %11 : vector<32x1xf32>
    %13 = vector.broadcast %12 : vector<32x1xf32> to vector<32x32xf32>
    %14 = arith.subf %4, %13 : vector<32x32xf32>
    %15 = arith.mulf %14, %14 : vector<32x32xf32>
    %cst_10 = arith.constant dense<0.000000e+00> : vector<32xf32>
    %16 = vector.multi_reduction <add>, %15, %cst_10 [1] : vector<32x32xf32> to vector<32xf32>
    %17 = vector.shape_cast %16 : vector<32xf32> to vector<32x1xf32>
    %cst_11 = arith.constant 3.200000e+01 : f32
    %18 = vector.broadcast %cst_11 : f32 to vector<32x1xf32>
    %19 = arith.divf %17, %18 : vector<32x1xf32>
    %cst_12 = arith.constant 9.99999997E-7 : f32
    %20 = vector.broadcast %cst_12 : f32 to vector<32x1xf32>
    %21 = arith.addf %19, %20 : vector<32x1xf32>
    %22 = math.rsqrt %21 : vector<32x1xf32>
    %23 = vector.broadcast %22 : vector<32x1xf32> to vector<32x32xf32>
    %24 = arith.mulf %14, %23 : vector<32x32xf32>
    %25 = vector.broadcast %6 : vector<1x32xf32> to vector<32x32xf32>
    %26 = arith.mulf %24, %25 : vector<32x32xf32>
    %27 = vector.broadcast %8 : vector<1x32xf32> to vector<32x32xf32>
    %28 = arith.addf %26, %27 : vector<32x32xf32>
    %29 = arith.truncf %28 : vector<32x32xf32> to vector<32x32xbf16>
    %c0_13 = arith.constant 0 : index
    %c0_14 = arith.constant 0 : index
    %c0_15 = arith.constant 0 : index
    %30 = vector.load %arg5[%c0_13, %c0_14, %c0_15] : memref<1x32x32xbf16, #tpu.memory_space<vmem>>, vector<1x32x32xbf16>
    %31 = vector.shape_cast %30 : vector<1x32x32xbf16> to vector<32x32xbf16>
    %cst_16 = arith.constant dense<0.000000e+00> : vector<32x32xf32>
    %32 = tpu.matmul %29, %31, %cst_16 {dimension_numbers = #tpu.dot_dimension_numbers<[1], [0], [0], [1], [0, 0, 1, 1], [], []>} : vector<32x32xbf16>, vector<32x32xbf16>, vector<32x32xf32> -> vector<32x32xf32>
    %c0_17 = arith.constant 0 : index
    %c0_18 = arith.constant 0 : index
    %c0_19 = arith.constant 0 : index
    %33 = vector.load %arg6[%c0_17, %c0_18, %c0_19] : memref<1x1x32xf32, #tpu.memory_space<vmem>>, vector<1x1x32xf32>
    %34 = vector.shape_cast %33 : vector<1x1x32xf32> to vector<1x32xf32>
    %35 = vector.broadcast %34 : vector<1x32xf32> to vector<32x32xf32>
    %36 = arith.addf %32, %35 : vector<32x32xf32>
    %37 = vector.shape_cast %36 : vector<32x32xf32> to vector<2x16x32xf32>
    %38 = arith.truncf %37 : vector<2x16x32xf32> to vector<2x16x32xbf16>
    %c0_20 = arith.constant 0 : index
    %c0_21 = arith.constant 0 : index
    %c0_22 = arith.constant 0 : index
    %39 = vector.load %arg7[%c0_20, %c0_21, %c0_22] : memref<1x32x32xbf16, #tpu.memory_space<vmem>>, vector<1x32x32xbf16>
    %40 = vector.shape_cast %39 : vector<1x32x32xbf16> to vector<32x32xbf16>
    %cst_23 = arith.constant dense<0.000000e+00> : vector<32x32xf32>
    %41 = tpu.matmul %29, %40, %cst_23 {dimension_numbers = #tpu.dot_dimension_numbers<[1], [0], [0], [1], [0, 0, 1, 1], [], []>} : vector<32x32xbf16>, vector<32x32xbf16>, vector<32x32xf32> -> vector<32x32xf32>
    %c0_24 = arith.constant 0 : index
    %c0_25 = arith.constant 0 : index
    %c0_26 = arith.constant 0 : index
    %42 = vector.load %arg8[%c0_24, %c0_25, %c0_26] : memref<1x1x32xf32, #tpu.memory_space<vmem>>, vector<1x1x32xf32>
    %43 = vector.shape_cast %42 : vector<1x1x32xf32> to vector<1x32xf32>
    %44 = vector.broadcast %43 : vector<1x32xf32> to vector<32x32xf32>
    %45 = arith.addf %41, %44 : vector<32x32xf32>
    %46 = vector.shape_cast %45 : vector<32x32xf32> to vector<2x16x32xf32>
    %47 = arith.truncf %46 : vector<2x16x32xf32> to vector<2x16x32xbf16>
    %c0_27 = arith.constant 0 : index
    %c0_28 = arith.constant 0 : index
    %c0_29 = arith.constant 0 : index
    %48 = vector.load %arg9[%c0_27, %c0_28, %c0_29] : memref<1x32x32xbf16, #tpu.memory_space<vmem>>, vector<1x32x32xbf16>
    %49 = vector.shape_cast %48 : vector<1x32x32xbf16> to vector<32x32xbf16>
    %cst_30 = arith.constant dense<0.000000e+00> : vector<32x32xf32>
    %50 = tpu.matmul %29, %49, %cst_30 {dimension_numbers = #tpu.dot_dimension_numbers<[1], [0], [0], [1], [0, 0, 1, 1], [], []>} : vector<32x32xbf16>, vector<32x32xbf16>, vector<32x32xf32> -> vector<32x32xf32>
    %c0_31 = arith.constant 0 : index
    %c0_32 = arith.constant 0 : index
    %c0_33 = arith.constant 0 : index
    %51 = vector.load %arg10[%c0_31, %c0_32, %c0_33] : memref<1x1x32xf32, #tpu.memory_space<vmem>>, vector<1x1x32xf32>
    %52 = vector.shape_cast %51 : vector<1x1x32xf32> to vector<1x32xf32>
    %53 = vector.broadcast %52 : vector<1x32xf32> to vector<32x32xf32>
    %54 = arith.addf %50, %53 : vector<32x32xf32>
    %55 = vector.shape_cast %54 : vector<32x32xf32> to vector<2x16x32xf32>
    %56 = arith.truncf %55 : vector<2x16x32xf32> to vector<2x16x32xbf16>
    %57 = vector.extract_strided_slice %38 {offsets = [0, 0, 0], sizes = [2, 16, 8], strides = [1, 1, 1]} : vector<2x16x32xbf16> to vector<2x16x8xbf16>
    %58 = vector.extract_strided_slice %47 {offsets = [0, 0, 0], sizes = [2, 16, 8], strides = [1, 1, 1]} : vector<2x16x32xbf16> to vector<2x16x8xbf16>
    %59 = vector.extract_strided_slice %56 {offsets = [0, 0, 0], sizes = [2, 16, 8], strides = [1, 1, 1]} : vector<2x16x32xbf16> to vector<2x16x8xbf16>
    "tpu.trace_start"() <{level = 10 : i32, message = "bqd,bkd->bqk"}> : () -> ()
    %cst_34 = arith.constant dense<0.000000e+00> : vector<2x16x16xf32>
    %60 = tpu.matmul %57, %58, %cst_34 {dimension_numbers = #tpu.dot_dimension_numbers<[2], [2], [1], [1], [0, 0, 0, 1, 1, 1], [0], [0]>} : vector<2x16x8xbf16>, vector<2x16x8xbf16>, vector<2x16x16xf32> -> vector<2x16x16xf32>
    "tpu.trace_stop"() : () -> ()
    %cst_35 = arith.constant 0.353553385 : f32
    %61 = vector.broadcast %cst_35 : f32 to vector<2x16x16xf32>
    %62 = arith.mulf %60, %61 : vector<2x16x16xf32>
    %cst_36 = arith.constant dense<0xFF800000> : vector<2x16xf32>
    %63 = vector.multi_reduction <maximumf>, %62, %cst_36 [2] : vector<2x16x16xf32> to vector<2x16xf32>
    %64 = vector.shape_cast %63 : vector<2x16xf32> to vector<2x16x1xf32>
    %65 = vector.broadcast %64 : vector<2x16x1xf32> to vector<2x16x16xf32>
    %66 = arith.subf %62, %65 : vector<2x16x16xf32>
    %67 = math.exp %66 : vector<2x16x16xf32>
    %cst_37 = arith.constant dense<0.000000e+00> : vector<2x16xf32>
    %68 = vector.multi_reduction <add>, %67, %cst_37 [2] : vector<2x16x16xf32> to vector<2x16xf32>
    %69 = vector.shape_cast %68 : vector<2x16xf32> to vector<2x16x1xf32>
    %70 = tpu.reciprocal %69 {approx = true} : vector<2x16x1xf32> -> vector<2x16x1xf32>
    %71 = vector.broadcast %70 : vector<2x16x1xf32> to vector<2x16x16xf32>
    %72 = arith.mulf %67, %71 : vector<2x16x16xf32>
    %73 = arith.truncf %72 : vector<2x16x16xf32> to vector<2x16x16xbf16>
    "tpu.trace_start"() <{level = 10 : i32, message = "bqk,bkd->bqd"}> : () -> ()
    %cst_38 = arith.constant dense<0.000000e+00> : vector<2x16x8xf32>
    %74 = tpu.matmul %73, %59, %cst_38 {dimension_numbers = #tpu.dot_dimension_numbers<[2], [1], [1], [2], [0, 0, 0, 1, 1, 2], [0], [0]>} : vector<2x16x16xbf16>, vector<2x16x8xbf16>, vector<2x16x8xf32> -> vector<2x16x8xf32>
    "tpu.trace_stop"() : () -> ()
    %75 = arith.truncf %74 : vector<2x16x8xf32> to vector<2x16x8xbf16>
    %c0_39 = arith.constant 0 : index
    %c0_40 = arith.constant 0 : index
    %c0_41 = arith.constant 0 : index
    %76 = vector.load %arg20[%c0_39, %c0_40, %c0_41] : memref<2x16x32xbf16, #tpu.memory_space<vmem>>, vector<2x16x8xbf16>
    tpu.vector_store %arg20[%c0_39, %c0_40, %c0_41], %75 {strides = array<i32>} : memref<2x16x32xbf16, #tpu.memory_space<vmem>>, vector<2x16x8xbf16>,
    %77 = vector.extract_strided_slice %38 {offsets = [0, 0, 8], sizes = [2, 16, 8], strides = [1, 1, 1]} : vector<2x16x32xbf16> to vector<2x16x8xbf16>
    %78 = vector.extract_strided_slice %47 {offsets = [0, 0, 8], sizes = [2, 16, 8], strides = [1, 1, 1]} : vector<2x16x32xbf16> to vector<2x16x8xbf16>
    %79 = vector.extract_strided_slice %56 {offsets = [0, 0, 8], sizes = [2, 16, 8], strides = [1, 1, 1]} : vector<2x16x32xbf16> to vector<2x16x8xbf16>
    "tpu.trace_start"() <{level = 10 : i32, message = "bqd,bkd->bqk"}> : () -> ()
    %cst_42 = arith.constant dense<0.000000e+00> : vector<2x16x16xf32>
    %80 = tpu.matmul %77, %78, %cst_42 {dimension_numbers = #tpu.dot_dimension_numbers<[2], [2], [1], [1], [0, 0, 0, 1, 1, 1], [0], [0]>} : vector<2x16x8xbf16>, vector<2x16x8xbf16>, vector<2x16x16xf32> -> vector<2x16x16xf32>
    "tpu.trace_stop"() : () -> ()
    %cst_43 = arith.constant 0.353553385 : f32
    %81 = vector.broadcast %cst_43 : f32 to vector<2x16x16xf32>
    %82 = arith.mulf %80, %81 : vector<2x16x16xf32>
    %cst_44 = arith.constant dense<0xFF800000> : vector<2x16xf32>
    %83 = vector.multi_reduction <maximumf>, %82, %cst_44 [2] : vector<2x16x16xf32> to vector<2x16xf32>
    %84 = vector.shape_cast %83 : vector<2x16xf32> to vector<2x16x1xf32>
    %85 = vector.broadcast %84 : vector<2x16x1xf32> to vector<2x16x16xf32>
    %86 = arith.subf %82, %85 : vector<2x16x16xf32>
    %87 = math.exp %86 : vector<2x16x16xf32>
    %cst_45 = arith.constant dense<0.000000e+00> : vector<2x16xf32>
    %88 = vector.multi_reduction <add>, %87, %cst_45 [2] : vector<2x16x16xf32> to vector<2x16xf32>
    %89 = vector.shape_cast %88 : vector<2x16xf32> to vector<2x16x1xf32>
    %90 = tpu.reciprocal %89 {approx = true} : vector<2x16x1xf32> -> vector<2x16x1xf32>
    %91 = vector.broadcast %90 : vector<2x16x1xf32> to vector<2x16x16xf32>
    %92 = arith.mulf %87, %91 : vector<2x16x16xf32>
    %93 = arith.truncf %92 : vector<2x16x16xf32> to vector<2x16x16xbf16>
    "tpu.trace_start"() <{level = 10 : i32, message = "bqk,bkd->bqd"}> : () -> ()
    %cst_46 = arith.constant dense<0.000000e+00> : vector<2x16x8xf32>
    %94 = tpu.matmul %93, %79, %cst_46 {dimension_numbers = #tpu.dot_dimension_numbers<[2], [1], [1], [2], [0, 0, 0, 1, 1, 2], [0], [0]>} : vector<2x16x16xbf16>, vector<2x16x8xbf16>, vector<2x16x8xf32> -> vector<2x16x8xf32>
    "tpu.trace_stop"() : () -> ()
    %95 = arith.truncf %94 : vector<2x16x8xf32> to vector<2x16x8xbf16>
    %c0_47 = arith.constant 0 : index
    %c0_48 = arith.constant 0 : index
    %c8 = arith.constant 8 : index
    %96 = vector.load %arg20[%c0_47, %c0_48, %c8] : memref<2x16x32xbf16, #tpu.memory_space<vmem>>, vector<2x16x8xbf16>
    tpu.vector_store %arg20[%c0_47, %c0_48, %c8], %95 {strides = array<i32>} : memref<2x16x32xbf16, #tpu.memory_space<vmem>>, vector<2x16x8xbf16>,
    %97 = vector.extract_strided_slice %38 {offsets = [0, 0, 16], sizes = [2, 16, 8], strides = [1, 1, 1]} : vector<2x16x32xbf16> to vector<2x16x8xbf16>
    %98 = vector.extract_strided_slice %47 {offsets = [0, 0, 16], sizes = [2, 16, 8], strides = [1, 1, 1]} : vector<2x16x32xbf16> to vector<2x16x8xbf16>
    %99 = vector.extract_strided_slice %56 {offsets = [0, 0, 16], sizes = [2, 16, 8], strides = [1, 1, 1]} : vector<2x16x32xbf16> to vector<2x16x8xbf16>
    "tpu.trace_start"() <{level = 10 : i32, message = "bqd,bkd->bqk"}> : () -> ()
    %cst_49 = arith.constant dense<0.000000e+00> : vector<2x16x16xf32>
    %100 = tpu.matmul %97, %98, %cst_49 {dimension_numbers = #tpu.dot_dimension_numbers<[2], [2], [1], [1], [0, 0, 0, 1, 1, 1], [0], [0]>} : vector<2x16x8xbf16>, vector<2x16x8xbf16>, vector<2x16x16xf32> -> vector<2x16x16xf32>
    "tpu.trace_stop"() : () -> ()
    %cst_50 = arith.constant 0.353553385 : f32
    %101 = vector.broadcast %cst_50 : f32 to vector<2x16x16xf32>
    %102 = arith.mulf %100, %101 : vector<2x16x16xf32>
    %cst_51 = arith.constant dense<0xFF800000> : vector<2x16xf32>
    %103 = vector.multi_reduction <maximumf>, %102, %cst_51 [2] : vector<2x16x16xf32> to vector<2x16xf32>
    %104 = vector.shape_cast %103 : vector<2x16xf32> to vector<2x16x1xf32>
    %105 = vector.broadcast %104 : vector<2x16x1xf32> to vector<2x16x16xf32>
    %106 = arith.subf %102, %105 : vector<2x16x16xf32>
    %107 = math.exp %106 : vector<2x16x16xf32>
    %cst_52 = arith.constant dense<0.000000e+00> : vector<2x16xf32>
    %108 = vector.multi_reduction <add>, %107, %cst_52 [2] : vector<2x16x16xf32> to vector<2x16xf32>
    %109 = vector.shape_cast %108 : vector<2x16xf32> to vector<2x16x1xf32>
    %110 = tpu.reciprocal %109 {approx = true} : vector<2x16x1xf32> -> vector<2x16x1xf32>
    %111 = vector.broadcast %110 : vector<2x16x1xf32> to vector<2x16x16xf32>
    %112 = arith.mulf %107, %111 : vector<2x16x16xf32>
    %113 = arith.truncf %112 : vector<2x16x16xf32> to vector<2x16x16xbf16>
    "tpu.trace_start"() <{level = 10 : i32, message = "bqk,bkd->bqd"}> : () -> ()
    %cst_53 = arith.constant dense<0.000000e+00> : vector<2x16x8xf32>
    %114 = tpu.matmul %113, %99, %cst_53 {dimension_numbers = #tpu.dot_dimension_numbers<[2], [1], [1], [2], [0, 0, 0, 1, 1, 2], [0], [0]>} : vector<2x16x16xbf16>, vector<2x16x8xbf16>, vector<2x16x8xf32> -> vector<2x16x8xf32>
    "tpu.trace_stop"() : () -> ()
    %115 = arith.truncf %114 : vector<2x16x8xf32> to vector<2x16x8xbf16>
    %c0_54 = arith.constant 0 : index
    %c0_55 = arith.constant 0 : index
    %c16 = arith.constant 16 : index
    %116 = vector.load %arg20[%c0_54, %c0_55, %c16] : memref<2x16x32xbf16, #tpu.memory_space<vmem>>, vector<2x16x8xbf16>
    tpu.vector_store %arg20[%c0_54, %c0_55, %c16], %115 {strides = array<i32>} : memref<2x16x32xbf16, #tpu.memory_space<vmem>>, vector<2x16x8xbf16>,
    %117 = vector.extract_strided_slice %38 {offsets = [0, 0, 24], sizes = [2, 16, 8], strides = [1, 1, 1]} : vector<2x16x32xbf16> to vector<2x16x8xbf16>
    %118 = vector.extract_strided_slice %47 {offsets = [0, 0, 24], sizes = [2, 16, 8], strides = [1, 1, 1]} : vector<2x16x32xbf16> to vector<2x16x8xbf16>
    %119 = vector.extract_strided_slice %56 {offsets = [0, 0, 24], sizes = [2, 16, 8], strides = [1, 1, 1]} : vector<2x16x32xbf16> to vector<2x16x8xbf16>
    "tpu.trace_start"() <{level = 10 : i32, message = "bqd,bkd->bqk"}> : () -> ()
    %cst_56 = arith.constant dense<0.000000e+00> : vector<2x16x16xf32>
    %120 = tpu.matmul %117, %118, %cst_56 {dimension_numbers = #tpu.dot_dimension_numbers<[2], [2], [1], [1], [0, 0, 0, 1, 1, 1], [0], [0]>} : vector<2x16x8xbf16>, vector<2x16x8xbf16>, vector<2x16x16xf32> -> vector<2x16x16xf32>
    "tpu.trace_stop"() : () -> ()
    %cst_57 = arith.constant 0.353553385 : f32
    %121 = vector.broadcast %cst_57 : f32 to vector<2x16x16xf32>
    %122 = arith.mulf %120, %121 : vector<2x16x16xf32>
    %cst_58 = arith.constant dense<0xFF800000> : vector<2x16xf32>
    %123 = vector.multi_reduction <maximumf>, %122, %cst_58 [2] : vector<2x16x16xf32> to vector<2x16xf32>
    %124 = vector.shape_cast %123 : vector<2x16xf32> to vector<2x16x1xf32>
    %125 = vector.broadcast %124 : vector<2x16x1xf32> to vector<2x16x16xf32>
    %126 = arith.subf %122, %125 : vector<2x16x16xf32>
    %127 = math.exp %126 : vector<2x16x16xf32>
    %cst_59 = arith.constant dense<0.000000e+00> : vector<2x16xf32>
    %128 = vector.multi_reduction <add>, %127, %cst_59 [2] : vector<2x16x16xf32> to vector<2x16xf32>
    %129 = vector.shape_cast %128 : vector<2x16xf32> to vector<2x16x1xf32>
    %130 = tpu.reciprocal %129 {approx = true} : vector<2x16x1xf32> -> vector<2x16x1xf32>
    %131 = vector.broadcast %130 : vector<2x16x1xf32> to vector<2x16x16xf32>
    %132 = arith.mulf %127, %131 : vector<2x16x16xf32>
    %133 = arith.truncf %132 : vector<2x16x16xf32> to vector<2x16x16xbf16>
    "tpu.trace_start"() <{level = 10 : i32, message = "bqk,bkd->bqd"}> : () -> ()
    %cst_60 = arith.constant dense<0.000000e+00> : vector<2x16x8xf32>
    %134 = tpu.matmul %133, %119, %cst_60 {dimension_numbers = #tpu.dot_dimension_numbers<[2], [1], [1], [2], [0, 0, 0, 1, 1, 2], [0], [0]>} : vector<2x16x16xbf16>, vector<2x16x8xbf16>, vector<2x16x8xf32> -> vector<2x16x8xf32>
    "tpu.trace_stop"() : () -> ()
    %135 = arith.truncf %134 : vector<2x16x8xf32> to vector<2x16x8xbf16>
    %c0_61 = arith.constant 0 : index
    %c0_62 = arith.constant 0 : index
    %c24 = arith.constant 24 : index
    %136 = vector.load %arg20[%c0_61, %c0_62, %c24] : memref<2x16x32xbf16, #tpu.memory_space<vmem>>, vector<2x16x8xbf16>
    tpu.vector_store %arg20[%c0_61, %c0_62, %c24], %135 {strides = array<i32>} : memref<2x16x32xbf16, #tpu.memory_space<vmem>>, vector<2x16x8xbf16>,
    %c0_63 = arith.constant 0 : index
    %c0_64 = arith.constant 0 : index
    %c0_65 = arith.constant 0 : index
    %137 = vector.load %arg20[%c0_63, %c0_64, %c0_65] : memref<2x16x32xbf16, #tpu.memory_space<vmem>>, vector<2x16x32xbf16>
    %138 = vector.shape_cast %137 : vector<2x16x32xbf16> to vector<32x32xbf16>
    %c0_66 = arith.constant 0 : index
    %c0_67 = arith.constant 0 : index
    %c0_68 = arith.constant 0 : index
    %139 = vector.load %arg11[%c0_66, %c0_67, %c0_68] : memref<1x32x32xbf16, #tpu.memory_space<vmem>>, vector<1x32x32xbf16>
    %140 = vector.shape_cast %139 : vector<1x32x32xbf16> to vector<32x32xbf16>
    %cst_69 = arith.constant dense<0.000000e+00> : vector<32x32xf32>
    %141 = tpu.matmul %138, %140, %cst_69 {dimension_numbers = #tpu.dot_dimension_numbers<[1], [0], [0], [1], [0, 0, 1, 1], [], []>} : vector<32x32xbf16>, vector<32x32xbf16>, vector<32x32xf32> -> vector<32x32xf32>
    %142 = arith.addf %4, %141 : vector<32x32xf32>
    %c0_70 = arith.constant 0 : index
    %c0_71 = arith.constant 0 : index
    %c0_72 = arith.constant 0 : index
    %143 = vector.load %arg12[%c0_70, %c0_71, %c0_72] : memref<1x1x32xf32, #tpu.memory_space<vmem>>, vector<1x1x32xf32>
    %144 = vector.shape_cast %143 : vector<1x1x32xf32> to vector<1x32xf32>
    %145 = vector.broadcast %144 : vector<1x32xf32> to vector<32x32xf32>
    %146 = arith.addf %142, %145 : vector<32x32xf32>
    %c0_73 = arith.constant 0 : index
    %c0_74 = arith.constant 0 : index
    %c0_75 = arith.constant 0 : index
    %147 = vector.load %arg13[%c0_73, %c0_74, %c0_75] : memref<1x1x32xf32, #tpu.memory_space<vmem>>, vector<1x1x32xf32>
    %148 = vector.shape_cast %147 : vector<1x1x32xf32> to vector<1x32xf32>
    %c0_76 = arith.constant 0 : index
    %c0_77 = arith.constant 0 : index
    %c0_78 = arith.constant 0 : index
    %149 = vector.load %arg14[%c0_76, %c0_77, %c0_78] : memref<1x1x32xf32, #tpu.memory_space<vmem>>, vector<1x1x32xf32>
    %150 = vector.shape_cast %149 : vector<1x1x32xf32> to vector<1x32xf32>
    %cst_79 = arith.constant dense<0.000000e+00> : vector<32xf32>
    %151 = vector.multi_reduction <add>, %146, %cst_79 [1] : vector<32x32xf32> to vector<32xf32>
    %152 = vector.shape_cast %151 : vector<32xf32> to vector<32x1xf32>
    %cst_80 = arith.constant 3.200000e+01 : f32
    %153 = vector.broadcast %cst_80 : f32 to vector<32x1xf32>
    %154 = arith.divf %152, %153 : vector<32x1xf32>
    %155 = vector.broadcast %154 : vector<32x1xf32> to vector<32x32xf32>
    %156 = arith.subf %146, %155 : vector<32x32xf32>
    %157 = arith.mulf %156, %156 : vector<32x32xf32>
    %cst_81 = arith.constant dense<0.000000e+00> : vector<32xf32>
    %158 = vector.multi_reduction <add>, %157, %cst_81 [1] : vector<32x32xf32> to vector<32xf32>
    %159 = vector.shape_cast %158 : vector<32xf32> to vector<32x1xf32>
    %cst_82 = arith.constant 3.200000e+01 : f32
    %160 = vector.broadcast %cst_82 : f32 to vector<32x1xf32>
    %161 = arith.divf %159, %160 : vector<32x1xf32>
    %cst_83 = arith.constant 9.99999997E-7 : f32
    %162 = vector.broadcast %cst_83 : f32 to vector<32x1xf32>
    %163 = arith.addf %161, %162 : vector<32x1xf32>
    %164 = math.rsqrt %163 : vector<32x1xf32>
    %165 = vector.broadcast %164 : vector<32x1xf32> to vector<32x32xf32>
    %166 = arith.mulf %156, %165 : vector<32x32xf32>
    %167 = vector.broadcast %148 : vector<1x32xf32> to vector<32x32xf32>
    %168 = arith.mulf %166, %167 : vector<32x32xf32>
    %169 = vector.broadcast %150 : vector<1x32xf32> to vector<32x32xf32>
    %170 = arith.addf %168, %169 : vector<32x32xf32>
    %171 = arith.truncf %170 : vector<32x32xf32> to vector<32x32xbf16>
    %c0_84 = arith.constant 0 : index
    %c0_85 = arith.constant 0 : index
    %c0_86 = arith.constant 0 : index
    %172 = vector.load %arg15[%c0_84, %c0_85, %c0_86] : memref<1x32x128xbf16, #tpu.memory_space<vmem>>, vector<1x32x128xbf16>
    %173 = vector.shape_cast %172 : vector<1x32x128xbf16> to vector<32x128xbf16>
    %cst_87 = arith.constant dense<0.000000e+00> : vector<32x128xf32>
    %174 = tpu.matmul %171, %173, %cst_87 {dimension_numbers = #tpu.dot_dimension_numbers<[1], [0], [0], [1], [0, 0, 1, 1], [], []>} : vector<32x32xbf16>, vector<32x128xbf16>, vector<32x128xf32> -> vector<32x128xf32>
    %c0_88 = arith.constant 0 : index
    %c0_89 = arith.constant 0 : index
    %c0_90 = arith.constant 0 : index
    %175 = vector.load %arg16[%c0_88, %c0_89, %c0_90] : memref<1x1x128xf32, #tpu.memory_space<vmem>>, vector<1x1x128xf32>
    %176 = vector.shape_cast %175 : vector<1x1x128xf32> to vector<1x128xf32>
    %177 = vector.broadcast %176 : vector<1x128xf32> to vector<32x128xf32>
    %178 = arith.addf %174, %177 : vector<32x128xf32>
    %cst_91 = arith.constant 5.000000e-01 : f32
    %179 = vector.broadcast %cst_91 : f32 to vector<32x128xf32>
    %180 = arith.mulf %179, %178 : vector<32x128xf32>
    %181 = arith.mulf %178, %178 : vector<32x128xf32>
    %182 = arith.mulf %181, %178 : vector<32x128xf32>
    %cst_92 = arith.constant 4.471500e-02 : f32
    %183 = vector.broadcast %cst_92 : f32 to vector<32x128xf32>
    %184 = arith.mulf %183, %182 : vector<32x128xf32>
    %185 = arith.addf %178, %184 : vector<32x128xf32>
    %cst_93 = arith.constant 0.797884583 : f32
    %186 = vector.broadcast %cst_93 : f32 to vector<32x128xf32>
    %187 = arith.mulf %186, %185 : vector<32x128xf32>
    %188 = math.tanh %187 : vector<32x128xf32>
    %cst_94 = arith.constant 1.000000e+00 : f32
    %189 = vector.broadcast %cst_94 : f32 to vector<32x128xf32>
    %190 = arith.addf %189, %188 : vector<32x128xf32>
    %191 = arith.mulf %180, %190 : vector<32x128xf32>
    %192 = arith.truncf %191 : vector<32x128xf32> to vector<32x128xbf16>
    %c0_95 = arith.constant 0 : index
    %c0_96 = arith.constant 0 : index
    %c0_97 = arith.constant 0 : index
    %193 = vector.load %arg17[%c0_95, %c0_96, %c0_97] : memref<1x128x32xbf16, #tpu.memory_space<vmem>>, vector<1x128x32xbf16>
    %194 = vector.shape_cast %193 : vector<1x128x32xbf16> to vector<128x32xbf16>
    %cst_98 = arith.constant dense<0.000000e+00> : vector<32x32xf32>
    %195 = tpu.matmul %192, %194, %cst_98 {dimension_numbers = #tpu.dot_dimension_numbers<[1], [0], [0], [1], [0, 0, 1, 1], [], []>} : vector<32x128xbf16>, vector<128x32xbf16>, vector<32x32xf32> -> vector<32x32xf32>
    %c0_99 = arith.constant 0 : index
    %c0_100 = arith.constant 0 : index
    %c0_101 = arith.constant 0 : index
    %196 = vector.load %arg18[%c0_99, %c0_100, %c0_101] : memref<1x1x32xf32, #tpu.memory_space<vmem>>, vector<1x1x32xf32>
    %197 = vector.shape_cast %196 : vector<1x1x32xf32> to vector<1x32xf32>
    %198 = vector.broadcast %197 : vector<1x32xf32> to vector<32x32xf32>
    %199 = arith.addf %195, %198 : vector<32x32xf32>
    %200 = arith.addf %146, %199 : vector<32x32xf32>
    %201 = vector.shape_cast %200 : vector<32x32xf32> to vector<2x16x32xf32>
    %c0_102 = arith.constant 0 : index
    %c0_103 = arith.constant 0 : index
    %c0_104 = arith.constant 0 : index
    %202 = vector.load %arg19[%c0_102, %c0_103, %c0_104] : memref<2x16x32xf32, #tpu.memory_space<vmem>>, vector<2x16x32xf32>
    tpu.vector_store %arg19[%c0_102, %c0_103, %c0_104], %201 {strides = array<i32>} : memref<2x16x32xf32, #tpu.memory_space<vmem>>, vector<2x16x32xf32>,
    return
  }
  func.func @transform_0(%arg0: i32, %arg1: i32) -> (i32, i32, i32) {
    %c0_i32 = arith.constant 0 : i32
    %c0_i32_0 = arith.constant 0 : i32
    %c0_i32_1 = arith.constant 0 : i32
    return %arg0, %c0_i32, %c0_i32_0 : i32, i32, i32
  }
  func.func @transform_1(%arg0: i32, %arg1: i32) -> (i32, i32, i32) {
    %c0_i32 = arith.constant 0 : i32
    %c0_i32_0 = arith.constant 0 : i32
    %c0_i32_1 = arith.constant 0 : i32
    return %arg1, %c0_i32, %c0_i32_0 : i32, i32, i32
  }
  func.func @transform_2(%arg0: i32, %arg1: i32) -> (i32, i32, i32) {
    %c0_i32 = arith.constant 0 : i32
    %c0_i32_0 = arith.constant 0 : i32
    %c0_i32_1 = arith.constant 0 : i32
    return %arg1, %c0_i32, %c0_i32_0 : i32, i32, i32
  }
  func.func @transform_3(%arg0: i32, %arg1: i32) -> (i32, i32, i32) {
    %c0_i32 = arith.constant 0 : i32
    %c0_i32_0 = arith.constant 0 : i32
    %c0_i32_1 = arith.constant 0 : i32
    return %arg1, %c0_i32, %c0_i32_0 : i32, i32, i32
  }
  func.func @transform_4(%arg0: i32, %arg1: i32) -> (i32, i32, i32) {
    %c0_i32 = arith.constant 0 : i32
    %c0_i32_0 = arith.constant 0 : i32
    %c0_i32_1 = arith.constant 0 : i32
    return %arg1, %c0_i32, %c0_i32_0 : i32, i32, i32
  }
  func.func @transform_5(%arg0: i32, %arg1: i32) -> (i32, i32, i32) {
    %c0_i32 = arith.constant 0 : i32
    %c0_i32_0 = arith.constant 0 : i32
    %c0_i32_1 = arith.constant 0 : i32
    return %arg1, %c0_i32, %c0_i32_0 : i32, i32, i32
  }
  func.func @transform_6(%arg0: i32, %arg1: i32) -> (i32, i32, i32) {
    %c0_i32 = arith.constant 0 : i32
    %c0_i32_0 = arith.constant 0 : i32
    %c0_i32_1 = arith.constant 0 : i32
    return %arg1, %c0_i32, %c0_i32_0 : i32, i32, i32
  }
  func.func @transform_7(%arg0: i32, %arg1: i32) -> (i32, i32, i32) {
    %c0_i32 = arith.constant 0 : i32
    %c0_i32_0 = arith.constant 0 : i32
    %c0_i32_1 = arith.constant 0 : i32
    return %arg1, %c0_i32, %c0_i32_0 : i32, i32, i32
  }
  func.func @transform_8(%arg0: i32, %arg1: i32) -> (i32, i32, i32) {
    %c0_i32 = arith.constant 0 : i32
    %c0_i32_0 = arith.constant 0 : i32
    %c0_i32_1 = arith.constant 0 : i32
    return %arg1, %c0_i32, %c0_i32_0 : i32, i32, i32
  }
  func.func @transform_9(%arg0: i32, %arg1: i32) -> (i32, i32, i32) {
    %c0_i32 = arith.constant 0 : i32
    %c0_i32_0 = arith.constant 0 : i32
    %c0_i32_1 = arith.constant 0 : i32
    return %arg1, %c0_i32, %c0_i32_0 : i32, i32, i32
  }
  func.func @transform_10(%arg0: i32, %arg1: i32) -> (i32, i32, i32) {
    %c0_i32 = arith.constant 0 : i32
    %c0_i32_0 = arith.constant 0 : i32
    %c0_i32_1 = arith.constant 0 : i32
    return %arg1, %c0_i32, %c0_i32_0 : i32, i32, i32
  }
  func.func @transform_11(%arg0: i32, %arg1: i32) -> (i32, i32, i32) {
    %c0_i32 = arith.constant 0 : i32
    %c0_i32_0 = arith.constant 0 : i32
    %c0_i32_1 = arith.constant 0 : i32
    return %arg1, %c0_i32, %c0_i32_0 : i32, i32, i32
  }
  func.func @transform_12(%arg0: i32, %arg1: i32) -> (i32, i32, i32) {
    %c0_i32 = arith.constant 0 : i32
    %c0_i32_0 = arith.constant 0 : i32
    %c0_i32_1 = arith.constant 0 : i32
    return %arg1, %c0_i32, %c0_i32_0 : i32, i32, i32
  }
  func.func @transform_13(%arg0: i32, %arg1: i32) -> (i32, i32, i32) {
    %c0_i32 = arith.constant 0 : i32
    %c0_i32_0 = arith.constant 0 : i32
    %c0_i32_1 = arith.constant 0 : i32
    return %arg1, %c0_i32, %c0_i32_0 : i32, i32, i32
  }
  func.func @transform_14(%arg0: i32, %arg1: i32) -> (i32, i32, i32) {
    %c0_i32 = arith.constant 0 : i32
    %c0_i32_0 = arith.constant 0 : i32
    %c0_i32_1 = arith.constant 0 : i32
    return %arg1, %c0_i32, %c0_i32_0 : i32, i32, i32
  }
  func.func @transform_15(%arg0: i32, %arg1: i32) -> (i32, i32, i32) {
    %c0_i32 = arith.constant 0 : i32
    %c0_i32_0 = arith.constant 0 : i32
    %c0_i32_1 = arith.constant 0 : i32
    return %arg1, %c0_i32, %c0_i32_0 : i32, i32, i32
  }
  func.func @transform_16(%arg0: i32, %arg1: i32) -> (i32, i32, i32) {
    %c0_i32 = arith.constant 0 : i32
    %c0_i32_0 = arith.constant 0 : i32
    %c0_i32_1 = arith.constant 0 : i32
    return %arg1, %c0_i32, %c0_i32_0 : i32, i32, i32
  }
  func.func @transform_17(%arg0: i32, %arg1: i32) -> (i32, i32, i32) {
    %c0_i32 = arith.constant 0 : i32
    %c0_i32_0 = arith.constant 0 : i32
    %c0_i32_1 = arith.constant 0 : i32
    return %arg0, %c0_i32, %c0_i32_0 : i32, i32, i32
  }
}

</mosaic_0001>

<llo_original>
// kernel: tpu_custom_call.1
$region0: #{tpu_custom_call.1}
  #allocation0 [shape = 'u32[]', space=smem, size = 0x4, offset = 0x4, fixed_abs, tag = 'smem constant byte address 0x4 - core index']
  #allocation1 [shape = 'u32[72,128]{1,0:T(1,128)}', space=vmem, size = 0x9000, scoped, tag = 'internal scratch']
  #allocation2 [shape = 'bf16[2,16,32]{2,1,0:T(8,128)(2,1)}', space=vmem, size = 0x2000, scoped, tag = 'scratch operand']
  %s0 = inlined_call_operand.hbm [shape: f32[4,16,32], index: 0, kind: input, shape index: {}, may-alias: {0,17}]
  %s1 = inlined_call_operand.vmem [shape: f32[2,1,32], index: 1, kind: input, shape index: {}]
  %s2 = inlined_call_operand.vmem [shape: f32[2,1,32], index: 2, kind: input, shape index: {}]
  %s3 = inlined_call_operand.vmem [shape: bf16[2,32,32], index: 3, kind: input, shape index: {}]
  %s4 = inlined_call_operand.vmem [shape: f32[2,1,32], index: 4, kind: input, shape index: {}]
  %s5 = inlined_call_operand.vmem [shape: bf16[2,32,32], index: 5, kind: input, shape index: {}]
  %s6 = inlined_call_operand.vmem [shape: f32[2,1,32], index: 6, kind: input, shape index: {}]
  %s7 = inlined_call_operand.vmem [shape: bf16[2,32,32], index: 7, kind: input, shape index: {}]
  %s8 = inlined_call_operand.vmem [shape: f32[2,1,32], index: 8, kind: input, shape index: {}]
  %s9 = inlined_call_operand.vmem [shape: bf16[2,32,32], index: 9, kind: input, shape index: {}]
  %s10 = inlined_call_operand.vmem [shape: f32[2,1,32], index: 10, kind: input, shape index: {}]
  %s11 = inlined_call_operand.vmem [shape: f32[2,1,32], index: 11, kind: input, shape index: {}]
  %s12 = inlined_call_operand.vmem [shape: f32[2,1,32], index: 12, kind: input, shape index: {}]
  %s13 = inlined_call_operand.vmem [shape: bf16[2,32,128], index: 13, kind: input, shape index: {}]
  %s14 = inlined_call_operand.vmem [shape: f32[2,1,128], index: 14, kind: input, shape index: {}]
  %s15 = inlined_call_operand.vmem [shape: bf16[2,128,32], index: 15, kind: input, shape index: {}]
  %s16 = inlined_call_operand.vmem [shape: f32[2,1,32], index: 16, kind: input, shape index: {}]
  %s17 = inlined_call_operand.hbm [shape: f32[4,16,32], index: 17, kind: output, shape index: {}, may-alias: {0,17}]
  %s18 = sld [smem:[#allocation0]]
  $region109: #{tpu_custom_call.1} parent=0
    _
  %s20 = ssub.s32 1, %s18
  %s21 = scalar_select 0, %s20, %s18
  $region1: #{tpu_custom_call.1} parent=0
    #allocation3 [shape = 'u8[32768]{0}', space=vmem, size = 0x8000, scoped, tag = 'input window, operand 0']
    #allocation4 [shape = 's32[2]{0}', space=sflag, size = 0x8, scoped, tag = 'scoped memory for tpu_custom_call.1']
    #allocation5 [shape = 's32[2]{0}', space=sflag, size = 0x8, scoped, tag = 'scoped memory for tpu_custom_call.1']
    #allocation6 [shape = 'u8[32768]{0}', space=vmem, size = 0x8000, scoped, tag = 'output window, operand 0']
    %22 = vsyncpa [#allocation4], 0
    %s23 = scalar_lea.sflag [#allocation4], 1
    %24 = vsyncpa %s23, 0
    %25 = vsyncpa [#allocation5], 0
    %s26 = scalar_lea.sflag [#allocation5], 1
    %27 = vsyncpa %s26, 0
    loop: start=0, step=1, limit=6
    $region2: #{tpu_custom_call.1} parent=1 // loop_pre_header
      _
    $region3: #{tpu_custom_call.1} parent=1 // loop_header
      %s29 = sphi 0, %s33
      %p30 = scmp.ge.s32.totalorder %s29, 6
      %s36 = sphi 0, %s48
      %s37 = sphi 0, %s44
      %s38 = sphi 0, %s36
      %s39 = sphi 0, %s37
      %s40 = sphi 0, %s38
      %s41 = sphi 0, %s39
      %s51 = sphi 0, %s53
      %s54 = sphi 0, %s51
      %s55 = sphi 0, %s54
      %s71 = sphi 0, %s55
      %s77 = sphi 0, %s79
      %s80 = sphi 0, %s77
      %s81 = sphi 0, %s80
      %s97 = sphi 0, %s81
      %s103 = sphi 0, %s105
      %s106 = sphi 0, %s103
      %s107 = sphi 0, %s106
      %s123 = sphi 0, %s107
      %s129 = sphi 0, %s131
      %s132 = sphi 0, %s129
      %s133 = sphi 0, %s132
      %s149 = sphi 0, %s133
      %s155 = sphi 0, %s157
      %s158 = sphi 0, %s155
      %s159 = sphi 0, %s158
      %s175 = sphi 0, %s159
      %s181 = sphi 0, %s183
      %s184 = sphi 0, %s181
      %s185 = sphi 0, %s184
      %s201 = sphi 0, %s185
      %s207 = sphi 0, %s209
      %s210 = sphi 0, %s207
      %s211 = sphi 0, %s210
      %s227 = sphi 0, %s211
      %s233 = sphi 0, %s235
      %s236 = sphi 0, %s233
      %s237 = sphi 0, %s236
      %s253 = sphi 0, %s237
      %s259 = sphi 0, %s261
      %s262 = sphi 0, %s259
      %s263 = sphi 0, %s262
      %s279 = sphi 0, %s263
      %s285 = sphi 0, %s287
      %s288 = sphi 0, %s285
      %s289 = sphi 0, %s288
      %s305 = sphi 0, %s289
      %s311 = sphi 0, %s313
      %s314 = sphi 0, %s311
      %s315 = sphi 0, %s314
      %s331 = sphi 0, %s315
      %s337 = sphi 0, %s339
      %s340 = sphi 0, %s337
      %s341 = sphi 0, %s340
      %s357 = sphi 0, %s341
      %s363 = sphi 0, %s365
      %s366 = sphi 0, %s363
      %s367 = sphi 0, %s366
      %s383 = sphi 0, %s367
      %s389 = sphi 0, %s391
      %s392 = sphi 0, %s389
      %s393 = sphi 0, %s392
      %s409 = sphi 0, %s393
      %s415 = sphi 0, %s417
      %s418 = sphi 0, %s415
      %s419 = sphi 0, %s418
      %s435 = sphi 0, %s419
      %s441 = sphi 0, %s443
      %s444 = sphi 0, %s441
      %s445 = sphi 0, %s444
      %s461 = sphi 0, %s445
      %s467 = sphi 0, %s469
      %s470 = sphi 0, %s467
      %s471 = sphi 0, %s470
      %s487 = sphi 0, %s471
      %s493 = sphi 0, %s495
      %s496 = sphi 0, %s493
      %s497 = sphi 0, %s496
      %s513 = sphi 0, %s497
    $region4: #{tpu_custom_call.1} parent=1 // loop_header_branch
      %32 = sbr.rel (%p30) target = $region8
    $region5: #{tpu_custom_call.1} parent=1 // loop_body
      %s34 = ssub.s32 %s29, 1
      %s35 = ssub.s32 %s29, 2
      %s42 = sadd.s32 1, %s37
      %p43 = scmp.ge.s32.totalorder %s42, 2
      %s44 = scalar_select %p43, 0, %s42
      %s45 = sadd.s32 1, %s36
      %s46 = scalar_select %p43, %s45, %s36
      %p47 = scmp.ge.s32.totalorder %s46, 2
      %s48 = scalar_select %p47, 0, %s46
      %s49 = ssub.s32 %s36, %s48
      %p50 = scmp.eq.s32.totalorder %s49, 0
      %s52 = sadd.s32 %s51, 1
      %s53 = scalar_select %p50, %s51, %s52
      %p56 = pneg %p50
      %p57 = scmp.eq.s32.totalorder %s29, 3
      %p58 = por %p56, %p57
      %p59 = scmp.ne.s32.totalorder %s51, %s54
      %p60 = scmp.eq.s32.totalorder %s29, 0
      %p61 = por %p59, %p60
      %p62 = scmp.ne.s32.totalorder %s51, %s54
      %p63 = scmp.eq.s32.totalorder %s34, 3
      %p64 = por %p62, %p63
      %p65 = scmp.ne.s32.totalorder %s54, %s55
      %p66 = scmp.eq.s32.totalorder %s34, 0
      %p67 = por %p65, %p66
      %p68 = scmp.ne.s32.totalorder %s54, %s55
      %p69 = scmp.eq.s32.totalorder %s35, 3
      %p70 = por %p68, %p69
      %p72 = scmp.ne.s32.totalorder %s55, %s71
      %p73 = scmp.eq.s32.totalorder %s35, 0
      %p74 = por %p72, %p73
      %s75 = ssub.s32 %s37, %s44
      %p76 = scmp.eq.s32.totalorder %s75, 0
      %s78 = sadd.s32 %s77, 1
      %s79 = scalar_select %p76, %s77, %s78
      %p82 = pneg %p76
      %p83 = scmp.eq.s32.totalorder %s29, 3
      %p84 = por %p82, %p83
      %p85 = scmp.ne.s32.totalorder %s77, %s80
      %p86 = scmp.eq.s32.totalorder %s29, 0
      %p87 = por %p85, %p86
      %p88 = scmp.ne.s32.totalorder %s77, %s80
      %p89 = scmp.eq.s32.totalorder %s34, 3
      %p90 = por %p88, %p89
      %p91 = scmp.ne.s32.totalorder %s80, %s81
      %p92 = scmp.eq.s32.totalorder %s34, 0
      %p93 = por %p91, %p92
      %p94 = scmp.ne.s32.totalorder %s80, %s81
      %p95 = scmp.eq.s32.totalorder %s35, 3
      %p96 = por %p94, %p95
      %p98 = scmp.ne.s32.totalorder %s81, %s97
      %p99 = scmp.eq.s32.totalorder %s35, 0
      %p100 = por %p98, %p99
      %s101 = ssub.s32 %s37, %s44
      %p102 = scmp.eq.s32.totalorder %s101, 0
      %s104 = sadd.s32 %s103, 1
      %s105 = scalar_select %p102, %s103, %s104
      %p108 = pneg %p102
      %p109 = scmp.eq.s32.totalorder %s29, 3
      %p110 = por %p108, %p109
      %p111 = scmp.ne.s32.totalorder %s103, %s106
      %p112 = scmp.eq.s32.totalorder %s29, 0
      %p113 = por %p111, %p112
      %p114 = scmp.ne.s32.totalorder %s103, %s106
      %p115 = scmp.eq.s32.totalorder %s34, 3
      %p116 = por %p114, %p115
      %p117 = scmp.ne.s32.totalorder %s106, %s107
      %p118 = scmp.eq.s32.totalorder %s34, 0
      %p119 = por %p117, %p118
      %p120 = scmp.ne.s32.totalorder %s106, %s107
      %p121 = scmp.eq.s32.totalorder %s35, 3
      %p122 = por %p120, %p121
      %p124 = scmp.ne.s32.totalorder %s107, %s123
      %p125 = scmp.eq.s32.totalorder %s35, 0
      %p126 = por %p124, %p125
      %s127 = ssub.s32 %s37, %s44
      %p128 = scmp.eq.s32.totalorder %s127, 0
      %s130 = sadd.s32 %s129, 1
      %s131 = scalar_select %p128, %s129, %s130
      %p134 = pneg %p128
      %p135 = scmp.eq.s32.totalorder %s29, 3
      %p136 = por %p134, %p135
      %p137 = scmp.ne.s32.totalorder %s129, %s132
      %p138 = scmp.eq.s32.totalorder %s29, 0
      %p139 = por %p137, %p138
      %p140 = scmp.ne.s32.totalorder %s129, %s132
      %p141 = scmp.eq.s32.totalorder %s34, 3
      %p142 = por %p140, %p141
      %p143 = scmp.ne.s32.totalorder %s132, %s133
      %p144 = scmp.eq.s32.totalorder %s34, 0
      %p145 = por %p143, %p144
      %p146 = scmp.ne.s32.totalorder %s132, %s133
      %p147 = scmp.eq.s32.totalorder %s35, 3
      %p148 = por %p146, %p147
      %p150 = scmp.ne.s32.totalorder %s133, %s149
      %p151 = scmp.eq.s32.totalorder %s35, 0
      %p152 = por %p150, %p151
      %s153 = ssub.s32 %s37, %s44
      %p154 = scmp.eq.s32.totalorder %s153, 0
      %s156 = sadd.s32 %s155, 1
      %s157 = scalar_select %p154, %s155, %s156
      %p160 = pneg %p154
      %p161 = scmp.eq.s32.totalorder %s29, 3
      %p162 = por %p160, %p161
      %p163 = scmp.ne.s32.totalorder %s155, %s158
      %p164 = scmp.eq.s32.totalorder %s29, 0
      %p165 = por %p163, %p164
      %p166 = scmp.ne.s32.totalorder %s155, %s158
      %p167 = scmp.eq.s32.totalorder %s34, 3
      %p168 = por %p166, %p167
      %p169 = scmp.ne.s32.totalorder %s158, %s159
      %p170 = scmp.eq.s32.totalorder %s34, 0
      %p171 = por %p169, %p170
      %p172 = scmp.ne.s32.totalorder %s158, %s159
      %p173 = scmp.eq.s32.totalorder %s35, 3
      %p174 = por %p172, %p173
      %p176 = scmp.ne.s32.totalorder %s159, %s175
      %p177 = scmp.eq.s32.totalorder %s35, 0
      %p178 = por %p176, %p177
      %s179 = ssub.s32 %s37, %s44
      %p180 = scmp.eq.s32.totalorder %s179, 0
      %s182 = sadd.s32 %s181, 1
      %s183 = scalar_select %p180, %s181, %s182
      %p186 = pneg %p180
      %p187 = scmp.eq.s32.totalorder %s29, 3
      %p188 = por %p186, %p187
      %p189 = scmp.ne.s32.totalorder %s181, %s184
      %p190 = scmp.eq.s32.totalorder %s29, 0
      %p191 = por %p189, %p190
      %p192 = scmp.ne.s32.totalorder %s181, %s184
      %p193 = scmp.eq.s32.totalorder %s34, 3
      %p194 = por %p192, %p193
      %p195 = scmp.ne.s32.totalorder %s184, %s185
      %p196 = scmp.eq.s32.totalorder %s34, 0
      %p197 = por %p195, %p196
      %p198 = scmp.ne.s32.totalorder %s184, %s185
      %p199 = scmp.eq.s32.totalorder %s35, 3
      %p200 = por %p198, %p199
      %p202 = scmp.ne.s32.totalorder %s185, %s201
      %p203 = scmp.eq.s32.totalorder %s35, 0
      %p204 = por %p202, %p203
      %s205 = ssub.s32 %s37, %s44
      %p206 = scmp.eq.s32.totalorder %s205, 0
      %s208 = sadd.s32 %s207, 1
      %s209 = scalar_select %p206, %s207, %s208
      %p212 = pneg %p206
      %p213 = scmp.eq.s32.totalorder %s29, 3
      %p214 = por %p212, %p213
      %p215 = scmp.ne.s32.totalorder %s207, %s210
      %p216 = scmp.eq.s32.totalorder %s29, 0
      %p217 = por %p215, %p216
      %p218 = scmp.ne.s32.totalorder %s207, %s210
      %p219 = scmp.eq.s32.totalorder %s34, 3
      %p220 = por %p218, %p219
      %p221 = scmp.ne.s32.totalorder %s210, %s211
      %p222 = scmp.eq.s32.totalorder %s34, 0
      %p223 = por %p221, %p222
      %p224 = scmp.ne.s32.totalorder %s210, %s211
      %p225 = scmp.eq.s32.totalorder %s35, 3
      %p226 = por %p224, %p225
      %p228 = scmp.ne.s32.totalorder %s211, %s227
      %p229 = scmp.eq.s32.totalorder %s35, 0
      %p230 = por %p228, %p229
      %s231 = ssub.s32 %s37, %s44
      %p232 = scmp.eq.s32.totalorder %s231, 0
      %s234 = sadd.s32 %s233, 1
      %s235 = scalar_select %p232, %s233, %s234
      %p238 = pneg %p232
      %p239 = scmp.eq.s32.totalorder %s29, 3
      %p240 = por %p238, %p239
      %p241 = scmp.ne.s32.totalorder %s233, %s236
      %p242 = scmp.eq.s32.totalorder %s29, 0
      %p243 = por %p241, %p242
      %p244 = scmp.ne.s32.totalorder %s233, %s236
      %p245 = scmp.eq.s32.totalorder %s34, 3
      %p246 = por %p244, %p245
      %p247 = scmp.ne.s32.totalorder %s236, %s237
      %p248 = scmp.eq.s32.totalorder %s34, 0
      %p249 = por %p247, %p248
      %p250 = scmp.ne.s32.totalorder %s236, %s237
      %p251 = scmp.eq.s32.totalorder %s35, 3
      %p252 = por %p250, %p251
      %p254 = scmp.ne.s32.totalorder %s237, %s253
      %p255 = scmp.eq.s32.totalorder %s35, 0
      %p256 = por %p254, %p255
      %s257 = ssub.s32 %s37, %s44
      %p258 = scmp.eq.s32.totalorder %s257, 0
      %s260 = sadd.s32 %s259, 1
      %s261 = scalar_select %p258, %s259, %s260
      %p264 = pneg %p258
      %p265 = scmp.eq.s32.totalorder %s29, 3
      %p266 = por %p264, %p265
      %p267 = scmp.ne.s32.totalorder %s259, %s262
      %p268 = scmp.eq.s32.totalorder %s29, 0
      %p269 = por %p267, %p268
      %p270 = scmp.ne.s32.totalorder %s259, %s262
      %p271 = scmp.eq.s32.totalorder %s34, 3
      %p272 = por %p270, %p271
      %p273 = scmp.ne.s32.totalorder %s262, %s263
      %p274 = scmp.eq.s32.totalorder %s34, 0
      %p275 = por %p273, %p274
      %p276 = scmp.ne.s32.totalorder %s262, %s263
      %p277 = scmp.eq.s32.totalorder %s35, 3
      %p278 = por %p276, %p277
      %p280 = scmp.ne.s32.totalorder %s263, %s279
      %p281 = scmp.eq.s32.totalorder %s35, 0
      %p282 = por %p280, %p281
      %s283 = ssub.s32 %s37, %s44
      %p284 = scmp.eq.s32.totalorder %s283, 0
      %s286 = sadd.s32 %s285, 1
      %s287 = scalar_select %p284, %s285, %s286
      %p290 = pneg %p284
      %p291 = scmp.eq.s32.totalorder %s29, 3
      %p292 = por %p290, %p291
      %p293 = scmp.ne.s32.totalorder %s285, %s288
      %p294 = scmp.eq.s32.totalorder %s29, 0
      %p295 = por %p293, %p294
      %p296 = scmp.ne.s32.totalorder %s285, %s288
      %p297 = scmp.eq.s32.totalorder %s34, 3
      %p298 = por %p296, %p297
      %p299 = scmp.ne.s32.totalorder %s288, %s289
      %p300 = scmp.eq.s32.totalorder %s34, 0
      %p301 = por %p299, %p300
      %p302 = scmp.ne.s32.totalorder %s288, %s289
      %p303 = scmp.eq.s32.totalorder %s35, 3
      %p304 = por %p302, %p303
      %p306 = scmp.ne.s32.totalorder %s289, %s305
      %p307 = scmp.eq.s32.totalorder %s35, 0
      %p308 = por %p306, %p307
      %s309 = ssub.s32 %s37, %s44
      %p310 = scmp.eq.s32.totalorder %s309, 0
      %s312 = sadd.s32 %s311, 1
      %s313 = scalar_select %p310, %s311, %s312
      %p316 = pneg %p310
      %p317 = scmp.eq.s32.totalorder %s29, 3
      %p318 = por %p316, %p317
      %p319 = scmp.ne.s32.totalorder %s311, %s314
      %p320 = scmp.eq.s32.totalorder %s29, 0
      %p321 = por %p319, %p320
      %p322 = scmp.ne.s32.totalorder %s311, %s314
      %p323 = scmp.eq.s32.totalorder %s34, 3
      %p324 = por %p322, %p323
      %p325 = scmp.ne.s32.totalorder %s314, %s315
      %p326 = scmp.eq.s32.totalorder %s34, 0
      %p327 = por %p325, %p326
      %p328 = scmp.ne.s32.totalorder %s314, %s315
      %p329 = scmp.eq.s32.totalorder %s35, 3
      %p330 = por %p328, %p329
      %p332 = scmp.ne.s32.totalorder %s315, %s331
      %p333 = scmp.eq.s32.totalorder %s35, 0
      %p334 = por %p332, %p333
      %s335 = ssub.s32 %s37, %s44
      %p336 = scmp.eq.s32.totalorder %s335, 0
      %s338 = sadd.s32 %s337, 1
      %s339 = scalar_select %p336, %s337, %s338
      %p342 = pneg %p336
      %p343 = scmp.eq.s32.totalorder %s29, 3
      %p344 = por %p342, %p343
      %p345 = scmp.ne.s32.totalorder %s337, %s340
      %p346 = scmp.eq.s32.totalorder %s29, 0
      %p347 = por %p345, %p346
      %p348 = scmp.ne.s32.totalorder %s337, %s340
      %p349 = scmp.eq.s32.totalorder %s34, 3
      %p350 = por %p348, %p349
      %p351 = scmp.ne.s32.totalorder %s340, %s341
      %p352 = scmp.eq.s32.totalorder %s34, 0
      %p353 = por %p351, %p352
      %p354 = scmp.ne.s32.totalorder %s340, %s341
      %p355 = scmp.eq.s32.totalorder %s35, 3
      %p356 = por %p354, %p355
      %p358 = scmp.ne.s32.totalorder %s341, %s357
      %p359 = scmp.eq.s32.totalorder %s35, 0
      %p360 = por %p358, %p359
      %s361 = ssub.s32 %s37, %s44
      %p362 = scmp.eq.s32.totalorder %s361, 0
      %s364 = sadd.s32 %s363, 1
      %s365 = scalar_select %p362, %s363, %s364
      %p368 = pneg %p362
      %p369 = scmp.eq.s32.totalorder %s29, 3
      %p370 = por %p368, %p369
      %p371 = scmp.ne.s32.totalorder %s363, %s366
      %p372 = scmp.eq.s32.totalorder %s29, 0
      %p373 = por %p371, %p372
      %p374 = scmp.ne.s32.totalorder %s363, %s366
      %p375 = scmp.eq.s32.totalorder %s34, 3
      %p376 = por %p374, %p375
      %p377 = scmp.ne.s32.totalorder %s366, %s367
      %p378 = scmp.eq.s32.totalorder %s34, 0
      %p379 = por %p377, %p378
      %p380 = scmp.ne.s32.totalorder %s366, %s367
      %p381 = scmp.eq.s32.totalorder %s35, 3
      %p382 = por %p380, %p381
      %p384 = scmp.ne.s32.totalorder %s367, %s383
      %p385 = scmp.eq.s32.totalorder %s35, 0
      %p386 = por %p384, %p385
      %s387 = ssub.s32 %s37, %s44
      %p388 = scmp.eq.s32.totalorder %s387, 0
      %s390 = sadd.s32 %s389, 1
      %s391 = scalar_select %p388, %s389, %s390
      %p394 = pneg %p388
      %p395 = scmp.eq.s32.totalorder %s29, 3
      %p396 = por %p394, %p395
      %p397 = scmp.ne.s32.totalorder %s389, %s392
      %p398 = scmp.eq.s32.totalorder %s29, 0
      %p399 = por %p397, %p398
      %p400 = scmp.ne.s32.totalorder %s389, %s392
      %p401 = scmp.eq.s32.totalorder %s34, 3
      %p402 = por %p400, %p401
      %p403 = scmp.ne.s32.totalorder %s392, %s393
      %p404 = scmp.eq.s32.totalorder %s34, 0
      %p405 = por %p403, %p404
      %p406 = scmp.ne.s32.totalorder %s392, %s393
      %p407 = scmp.eq.s32.totalorder %s35, 3
      %p408 = por %p406, %p407
      %p410 = scmp.ne.s32.totalorder %s393, %s409
      %p411 = scmp.eq.s32.totalorder %s35, 0
      %p412 = por %p410, %p411
      %s413 = ssub.s32 %s37, %s44
      %p414 = scmp.eq.s32.totalorder %s413, 0
      %s416 = sadd.s32 %s415, 1
      %s417 = scalar_select %p414, %s415, %s416
      %p420 = pneg %p414
      %p421 = scmp.eq.s32.totalorder %s29, 3
      %p422 = por %p420, %p421
      %p423 = scmp.ne.s32.totalorder %s415, %s418
      %p424 = scmp.eq.s32.totalorder %s29, 0
      %p425 = por %p423, %p424
      %p426 = scmp.ne.s32.totalorder %s415, %s418
      %p427 = scmp.eq.s32.totalorder %s34, 3
      %p428 = por %p426, %p427
      %p429 = scmp.ne.s32.totalorder %s418, %s419
      %p430 = scmp.eq.s32.totalorder %s34, 0
      %p431 = por %p429, %p430
      %p432 = scmp.ne.s32.totalorder %s418, %s419
      %p433 = scmp.eq.s32.totalorder %s35, 3
      %p434 = por %p432, %p433
      %p436 = scmp.ne.s32.totalorder %s419, %s435
      %p437 = scmp.eq.s32.totalorder %s35, 0
      %p438 = por %p436, %p437
      %s439 = ssub.s32 %s37, %s44
      %p440 = scmp.eq.s32.totalorder %s439, 0
      %s442 = sadd.s32 %s441, 1
      %s443 = scalar_select %p440, %s441, %s442
      %p446 = pneg %p440
      %p447 = scmp.eq.s32.totalorder %s29, 3
      %p448 = por %p446, %p447
      %p449 = scmp.ne.s32.totalorder %s441, %s444
      %p450 = scmp.eq.s32.totalorder %s29, 0
      %p451 = por %p449, %p450
      %p452 = scmp.ne.s32.totalorder %s441, %s444
      %p453 = scmp.eq.s32.totalorder %s34, 3
      %p454 = por %p452, %p453
      %p455 = scmp.ne.s32.totalorder %s444, %s445
      %p456 = scmp.eq.s32.totalorder %s34, 0
      %p457 = por %p455, %p456
      %p458 = scmp.ne.s32.totalorder %s444, %s445
      %p459 = scmp.eq.s32.totalorder %s35, 3
      %p460 = por %p458, %p459
      %p462 = scmp.ne.s32.totalorder %s445, %s461
      %p463 = scmp.eq.s32.totalorder %s35, 0
      %p464 = por %p462, %p463
      %s465 = ssub.s32 %s37, %s44
      %p466 = scmp.eq.s32.totalorder %s465, 0
      %s468 = sadd.s32 %s467, 1
      %s469 = scalar_select %p466, %s467, %s468
      %p472 = pneg %p466
      %p473 = scmp.eq.s32.totalorder %s29, 3
      %p474 = por %p472, %p473
      %p475 = scmp.ne.s32.totalorder %s467, %s470
      %p476 = scmp.eq.s32.totalorder %s29, 0
      %p477 = por %p475, %p476
      %p478 = scmp.ne.s32.totalorder %s467, %s470
      %p479 = scmp.eq.s32.totalorder %s34, 3
      %p480 = por %p478, %p479
      %p481 = scmp.ne.s32.totalorder %s470, %s471
      %p482 = scmp.eq.s32.totalorder %s34, 0
      %p483 = por %p481, %p482
      %p484 = scmp.ne.s32.totalorder %s470, %s471
      %p485 = scmp.eq.s32.totalorder %s35, 3
      %p486 = por %p484, %p485
      %p488 = scmp.ne.s32.totalorder %s471, %s487
      %p489 = scmp.eq.s32.totalorder %s35, 0
      %p490 = por %p488, %p489
      %s491 = ssub.s32 %s36, %s48
      %p492 = scmp.eq.s32.totalorder %s491, 0
      %s494 = sadd.s32 %s493, 1
      %s495 = scalar_select %p492, %s493, %s494
      %p498 = pneg %p492
      %p499 = scmp.eq.s32.totalorder %s29, 3
      %p500 = por %p498, %p499
      %p501 = scmp.ne.s32.totalorder %s493, %s496
      %p502 = scmp.eq.s32.totalorder %s29, 0
      %p503 = por %p501, %p502
      %p504 = scmp.ne.s32.totalorder %s493, %s496
      %p505 = scmp.eq.s32.totalorder %s34, 3
      %p506 = por %p504, %p505
      %p507 = scmp.ne.s32.totalorder %s496, %s497
      %p508 = scmp.eq.s32.totalorder %s34, 0
      %p509 = por %p507, %p508
      %p510 = scmp.ne.s32.totalorder %s496, %s497
      %p511 = scmp.eq.s32.totalorder %s35, 3
      %p512 = por %p510, %p511
      %p514 = scmp.ne.s32.totalorder %s497, %s513
      %p515 = scmp.eq.s32.totalorder %s35, 0
      %p516 = por %p514, %p515
      %p517 = scmp.le.s32.totalorder 1, %s29
      %p518 = scmp.lt.s32.totalorder %s29, 5
      %p519 = pnand %p517, %p518
      %p520 = pneg %p519
      // Predicated region
      $region9: #{tpu_custom_call.1} parent=5 // pred_check
        _
      $region10: #{tpu_custom_call.1} parent=5 // pred_check_branch
        %522 = sbr.rel (%p519) target = $region12
      $region11: #{tpu_custom_call.1} parent=5 // pred_region
        %s523 = ssub.s32 %s29, 1
      $region12: #{tpu_custom_call.1} parent=5 // pred_fallthru
        _
      %p524 = scmp.lt.s32.totalorder %s29, 4
      // Predicated region
      $region13: #{tpu_custom_call.1} parent=5 // pred_check
        %p525 = pneg %p524
      $region14: #{tpu_custom_call.1} parent=5 // pred_check_branch
        %527 = sbr.rel (%p525) target = $region16
      $region15: #{tpu_custom_call.1} parent=5 // pred_region
        // Predicated region
        $region17: #{tpu_custom_call.1} parent=15 // pred_check
          %p528 = pneg %p61
        $region18: #{tpu_custom_call.1} parent=15 // pred_check_branch
          %530 = sbr.rel (%p528) target = $region20
        $region19: #{tpu_custom_call.1} parent=15 // pred_region
          %s531 = sand.u32 %s51, 1
          %s532 = scalar_lea.sflag [#allocation4], %s531
          %s533 = sand.u32 %s51, 1
          %s534 = smul.addr %s533, 32
          %s535 = scalar_lea.vmem [#allocation3], %s534
          %s536 = smul.u32 2, %s36
          %538 = vsyncadd %s532, 0
          %s539 = smul.addr %s536, 2
          %s540 = smul.addr %s539, 8
          %s541 = scalar_lea.hbm %s0, %s540
          %s542 = sshll.u32 %s541, 4
          %s543 = int_to_ptr.hbm [resolvable:$true] %s542
          %s544 = sshll.u32 %s535, 4
          %s545 = int_to_ptr.vmem [resolvable:$true] %s544
          %550 = dma.hbm_to_vmem [thread:$0]  %s543, 512, %s545, %s532, 128, 128, 8
        $region20: #{tpu_custom_call.1} parent=15 // pred_fallthru
          _
        // Predicated region
        $region21: #{tpu_custom_call.1} parent=15 // pred_check
          %p551 = pneg %p87
        $region22: #{tpu_custom_call.1} parent=15 // pred_check_branch
          %553 = sbr.rel (%p551) target = $region24
        $region23: #{tpu_custom_call.1} parent=15 // pred_region
          %p554 = scmp.lt.s32.totalorder %s37, 1
          %s555 = scalar_select %p554, %s37, 1
          %s556 = scalar_lea.vmem %s1, %s555
        $region24: #{tpu_custom_call.1} parent=15 // pred_fallthru
          _
        // Predicated region
        $region25: #{tpu_custom_call.1} parent=15 // pred_check
          %p557 = pneg %p113
        $region26: #{tpu_custom_call.1} parent=15 // pred_check_branch
          %559 = sbr.rel (%p557) target = $region28
        $region27: #{tpu_custom_call.1} parent=15 // pred_region
          %p560 = scmp.lt.s32.totalorder %s37, 1
          %s561 = scalar_select %p560, %s37, 1
          %s562 = scalar_lea.vmem %s2, %s561
        $region28: #{tpu_custom_call.1} parent=15 // pred_fallthru
          _
        // Predicated region
        $region29: #{tpu_custom_call.1} parent=15 // pred_check
          %p563 = pneg %p139
        $region30: #{tpu_custom_call.1} parent=15 // pred_check_branch
          %565 = sbr.rel (%p563) target = $region32
        $region31: #{tpu_custom_call.1} parent=15 // pred_region
          %p566 = scmp.lt.s32.totalorder %s37, 1
          %s567 = scalar_select %p566, %s37, 1
          %s568 = smul.addr %s567, 4
          %s569 = smul.addr %s568, 4
          %s570 = scalar_lea.vmem %s3, %s569
        $region32: #{tpu_custom_call.1} parent=15 // pred_fallthru
          _
        // Predicated region
        $region33: #{tpu_custom_call.1} parent=15 // pred_check
          %p571 = pneg %p165
        $region34: #{tpu_custom_call.1} parent=15 // pred_check_branch
          %573 = sbr.rel (%p571) target = $region36
        $region35: #{tpu_custom_call.1} parent=15 // pred_region
          %p574 = scmp.lt.s32.totalorder %s37, 1
          %s575 = scalar_select %p574, %s37, 1
          %s576 = scalar_lea.vmem %s4, %s575
        $region36: #{tpu_custom_call.1} parent=15 // pred_fallthru
          _
        // Predicated region
        $region37: #{tpu_custom_call.1} parent=15 // pred_check
          %p577 = pneg %p191
        $region38: #{tpu_custom_call.1} parent=15 // pred_check_branch
          %579 = sbr.rel (%p577) target = $region40
        $region39: #{tpu_custom_call.1} parent=15 // pred_region
          %p580 = scmp.lt.s32.totalorder %s37, 1
          %s581 = scalar_select %p580, %s37, 1
          %s582 = smul.addr %s581, 4
          %s583 = smul.addr %s582, 4
          %s584 = scalar_lea.vmem %s5, %s583
        $region40: #{tpu_custom_call.1} parent=15 // pred_fallthru
          _
        // Predicated region
        $region41: #{tpu_custom_call.1} parent=15 // pred_check
          %p585 = pneg %p217
        $region42: #{tpu_custom_call.1} parent=15 // pred_check_branch
          %587 = sbr.rel (%p585) target = $region44
        $region43: #{tpu_custom_call.1} parent=15 // pred_region
          %p588 = scmp.lt.s32.totalorder %s37, 1
          %s589 = scalar_select %p588, %s37, 1
          %s590 = scalar_lea.vmem %s6, %s589
        $region44: #{tpu_custom_call.1} parent=15 // pred_fallthru
          _
        // Predicated region
        $region45: #{tpu_custom_call.1} parent=15 // pred_check
          %p591 = pneg %p243
        $region46: #{tpu_custom_call.1} parent=15 // pred_check_branch
          %593 = sbr.rel (%p591) target = $region48
        $region47: #{tpu_custom_call.1} parent=15 // pred_region
          %p594 = scmp.lt.s32.totalorder %s37, 1
          %s595 = scalar_select %p594, %s37, 1
          %s596 = smul.addr %s595, 4
          %s597 = smul.addr %s596, 4
          %s598 = scalar_lea.vmem %s7, %s597
        $region48: #{tpu_custom_call.1} parent=15 // pred_fallthru
          _
        // Predicated region
        $region49: #{tpu_custom_call.1} parent=15 // pred_check
          %p599 = pneg %p269
        $region50: #{tpu_custom_call.1} parent=15 // pred_check_branch
          %601 = sbr.rel (%p599) target = $region52
        $region51: #{tpu_custom_call.1} parent=15 // pred_region
          %p602 = scmp.lt.s32.totalorder %s37, 1
          %s603 = scalar_select %p602, %s37, 1
          %s604 = scalar_lea.vmem %s8, %s603
        $region52: #{tpu_custom_call.1} parent=15 // pred_fallthru
          _
        // Predicated region
        $region53: #{tpu_custom_call.1} parent=15 // pred_check
          %p605 = pneg %p295
        $region54: #{tpu_custom_call.1} parent=15 // pred_check_branch
          %607 = sbr.rel (%p605) target = $region56
        $region55: #{tpu_custom_call.1} parent=15 // pred_region
          %p608 = scmp.lt.s32.totalorder %s37, 1
          %s609 = scalar_select %p608, %s37, 1
          %s610 = smul.addr %s609, 4
          %s611 = smul.addr %s610, 4
          %s612 = scalar_lea.vmem %s9, %s611
        $region56: #{tpu_custom_call.1} parent=15 // pred_fallthru
          _
        // Predicated region
        $region57: #{tpu_custom_call.1} parent=15 // pred_check
          %p613 = pneg %p321
        $region58: #{tpu_custom_call.1} parent=15 // pred_check_branch
          %615 = sbr.rel (%p613) target = $region60
        $region59: #{tpu_custom_call.1} parent=15 // pred_region
          %p616 = scmp.lt.s32.totalorder %s37, 1
          %s617 = scalar_select %p616, %s37, 1
          %s618 = scalar_lea.vmem %s10, %s617
        $region60: #{tpu_custom_call.1} parent=15 // pred_fallthru
          _
        // Predicated region
        $region61: #{tpu_custom_call.1} parent=15 // pred_check
          %p619 = pneg %p347
        $region62: #{tpu_custom_call.1} parent=15 // pred_check_branch
          %621 = sbr.rel (%p619) target = $region64
        $region63: #{tpu_custom_call.1} parent=15 // pred_region
          %p622 = scmp.lt.s32.totalorder %s37, 1
          %s623 = scalar_select %p622, %s37, 1
          %s624 = scalar_lea.vmem %s11, %s623
        $region64: #{tpu_custom_call.1} parent=15 // pred_fallthru
          _
        // Predicated region
        $region65: #{tpu_custom_call.1} parent=15 // pred_check
          %p625 = pneg %p373
        $region66: #{tpu_custom_call.1} parent=15 // pred_check_branch
          %627 = sbr.rel (%p625) target = $region68
        $region67: #{tpu_custom_call.1} parent=15 // pred_region
          %p628 = scmp.lt.s32.totalorder %s37, 1
          %s629 = scalar_select %p628, %s37, 1
          %s630 = scalar_lea.vmem %s12, %s629
        $region68: #{tpu_custom_call.1} parent=15 // pred_fallthru
          _
        // Predicated region
        $region69: #{tpu_custom_call.1} parent=15 // pred_check
          %p631 = pneg %p399
        $region70: #{tpu_custom_call.1} parent=15 // pred_check_branch
          %633 = sbr.rel (%p631) target = $region72
        $region71: #{tpu_custom_call.1} parent=15 // pred_region
          %p634 = scmp.lt.s32.totalorder %s37, 1
          %s635 = scalar_select %p634, %s37, 1
          %s636 = smul.addr %s635, 4
          %s637 = smul.addr %s636, 4
          %s638 = scalar_lea.vmem %s13, %s637
        $region72: #{tpu_custom_call.1} parent=15 // pred_fallthru
          _
        // Predicated region
        $region73: #{tpu_custom_call.1} parent=15 // pred_check
          %p639 = pneg %p425
        $region74: #{tpu_custom_call.1} parent=15 // pred_check_branch
          %641 = sbr.rel (%p639) target = $region76
        $region75: #{tpu_custom_call.1} parent=15 // pred_region
          %p642 = scmp.lt.s32.totalorder %s37, 1
          %s643 = scalar_select %p642, %s37, 1
          %s644 = scalar_lea.vmem %s14, %s643
        $region76: #{tpu_custom_call.1} parent=15 // pred_fallthru
          _
        // Predicated region
        $region77: #{tpu_custom_call.1} parent=15 // pred_check
          %p645 = pneg %p451
        $region78: #{tpu_custom_call.1} parent=15 // pred_check_branch
          %647 = sbr.rel (%p645) target = $region80
        $region79: #{tpu_custom_call.1} parent=15 // pred_region
          %p648 = scmp.lt.s32.totalorder %s37, 1
          %s649 = scalar_select %p648, %s37, 1
          %s650 = smul.addr %s649, 16
          %s651 = smul.addr %s650, 4
          %s652 = scalar_lea.vmem %s15, %s651
        $region80: #{tpu_custom_call.1} parent=15 // pred_fallthru
          _
        // Predicated region
        $region81: #{tpu_custom_call.1} parent=15 // pred_check
          %p653 = pneg %p477
        $region82: #{tpu_custom_call.1} parent=15 // pred_check_branch
          %655 = sbr.rel (%p653) target = $region84
        $region83: #{tpu_custom_call.1} parent=15 // pred_region
          %p656 = scmp.lt.s32.totalorder %s37, 1
          %s657 = scalar_select %p656, %s37, 1
          %s658 = scalar_lea.vmem %s16, %s657
        $region84: #{tpu_custom_call.1} parent=15 // pred_fallthru
          _
      $region16: #{tpu_custom_call.1} parent=5 // pred_fallthru
        _
      %p659 = scmp.le.s32.totalorder 1, %s29
      %p660 = scmp.lt.s32.totalorder %s29, 5
      %p661 = pnand %p659, %p660
      %p662 = pneg %p661
      // Predicated region
      $region85: #{tpu_custom_call.1} parent=5 // pred_check
        _
      $region86: #{tpu_custom_call.1} parent=5 // pred_check_branch
        %664 = sbr.rel (%p661) target = $region88
      $region87: #{tpu_custom_call.1} parent=5 // pred_region
        %s665 = ssub.s32 %s29, 1
        %s666 = sand.u32 %s54, 1
        %s667 = scalar_lea.sflag [#allocation4], %s666
        %s668 = sand.u32 %s54, 1
        %s669 = smul.addr %s668, 32
        %s670 = scalar_lea.vmem [#allocation3], %s669
        // Predicated region
        $region89: #{tpu_custom_call.1} parent=87 // pred_check
          %p671 = pneg %p67
        $region90: #{tpu_custom_call.1} parent=87 // pred_check_branch
          %673 = sbr.rel (%p671) target = $region92
        $region91: #{tpu_custom_call.1} parent=87 // pred_region
          %675 = dma.done %s667, 512
        $region92: #{tpu_custom_call.1} parent=87 // pred_fallthru
          _
        %s676 = sand.u32 %s54, 1
        %s677 = scalar_lea.sflag [#allocation4], %s676
        %s678 = sand.u32 %s54, 1
        %s679 = smul.addr %s678, 32
        %s680 = scalar_lea.vmem [#allocation3], %s679
        %p681 = pneg %p67
        %p682 = pneg %p64
        %p683 = scmp.lt.s32.totalorder %s39, 1
        %s684 = scalar_select %p683, %s39, 1
        %s685 = scalar_lea.vmem %s1, %s684
        %p686 = pneg %p93
        %p687 = pneg %p90
        %p688 = scmp.lt.s32.totalorder %s39, 1
        %s689 = scalar_select %p688, %s39, 1
        %s690 = scalar_lea.vmem %s2, %s689
        %p691 = pneg %p119
        %p692 = pneg %p116
        %p693 = scmp.lt.s32.totalorder %s39, 1
        %s694 = scalar_select %p693, %s39, 1
        %s695 = smul.addr %s694, 4
        %s696 = smul.addr %s695, 4
        %s697 = scalar_lea.vmem %s3, %s696
        %p698 = pneg %p145
        %p699 = pneg %p142
        %p700 = scmp.lt.s32.totalorder %s39, 1
        %s701 = scalar_select %p700, %s39, 1
        %s702 = scalar_lea.vmem %s4, %s701
        %p703 = pneg %p171
        %p704 = pneg %p168
        %p705 = scmp.lt.s32.totalorder %s39, 1
        %s706 = scalar_select %p705, %s39, 1
        %s707 = smul.addr %s706, 4
        %s708 = smul.addr %s707, 4
        %s709 = scalar_lea.vmem %s5, %s708
        %p710 = pneg %p197
        %p711 = pneg %p194
        %p712 = scmp.lt.s32.totalorder %s39, 1
        %s713 = scalar_select %p712, %s39, 1
        %s714 = scalar_lea.vmem %s6, %s713
        %p715 = pneg %p223
        %p716 = pneg %p220
        %p717 = scmp.lt.s32.totalorder %s39, 1
        %s718 = scalar_select %p717, %s39, 1
        %s719 = smul.addr %s718, 4
        %s720 = smul.addr %s719, 4
        %s721 = scalar_lea.vmem %s7, %s720
        %p722 = pneg %p249
        %p723 = pneg %p246
        %p724 = scmp.lt.s32.totalorder %s39, 1
        %s725 = scalar_select %p724, %s39, 1
        %s726 = scalar_lea.vmem %s8, %s725
        %p727 = pneg %p275
        %p728 = pneg %p272
        %p729 = scmp.lt.s32.totalorder %s39, 1
        %s730 = scalar_select %p729, %s39, 1
        %s731 = smul.addr %s730, 4
        %s732 = smul.addr %s731, 4
        %s733 = scalar_lea.vmem %s9, %s732
        %p734 = pneg %p301
        %p735 = pneg %p298
        %p736 = scmp.lt.s32.totalorder %s39, 1
        %s737 = scalar_select %p736, %s39, 1
        %s738 = scalar_lea.vmem %s10, %s737
        %p739 = pneg %p327
        %p740 = pneg %p324
        %p741 = scmp.lt.s32.totalorder %s39, 1
        %s742 = scalar_select %p741, %s39, 1
        %s743 = scalar_lea.vmem %s11, %s742
        %p744 = pneg %p353
        %p745 = pneg %p350
        %p746 = scmp.lt.s32.totalorder %s39, 1
        %s747 = scalar_select %p746, %s39, 1
        %s748 = scalar_lea.vmem %s12, %s747
        %p749 = pneg %p379
        %p750 = pneg %p376
        %p751 = scmp.lt.s32.totalorder %s39, 1
        %s752 = scalar_select %p751, %s39, 1
        %s753 = smul.addr %s752, 4
        %s754 = smul.addr %s753, 4
        %s755 = scalar_lea.vmem %s13, %s754
        %p756 = pneg %p405
        %p757 = pneg %p402
        %p758 = scmp.lt.s32.totalorder %s39, 1
        %s759 = scalar_select %p758, %s39, 1
        %s760 = scalar_lea.vmem %s14, %s759
        %p761 = pneg %p431
        %p762 = pneg %p428
        %p763 = scmp.lt.s32.totalorder %s39, 1
        %s764 = scalar_select %p763, %s39, 1
        %s765 = smul.addr %s764, 16
        %s766 = smul.addr %s765, 4
        %s767 = scalar_lea.vmem %s15, %s766
        %p768 = pneg %p457
        %p769 = pneg %p454
        %p770 = scmp.lt.s32.totalorder %s39, 1
        %s771 = scalar_select %p770, %s39, 1
        %s772 = scalar_lea.vmem %s16, %s771
        %p773 = pneg %p483
        %p774 = pneg %p480
        %p775 = pneg %p509
        %p776 = pneg %p506
        %s777 = sand.u32 %s496, 1
        %s778 = scalar_lea.sflag [#allocation5], %s777
        %s779 = sand.u32 %s496, 1
        %s780 = smul.addr %s779, 32
        %s781 = scalar_lea.vmem [#allocation6], %s780
        %s782 = smul.u32 2, %s38
        %p783 = scmp.lt.s32.totalorder %s39, 1
        %s784 = scalar_select %p783, %s39, 1
        %s785 = scalar_lea.vmem %s1, %s784
        %p786 = scmp.lt.s32.totalorder %s39, 1
        %s787 = scalar_select %p786, %s39, 1
        %s788 = scalar_lea.vmem %s2, %s787
        %p789 = scmp.lt.s32.totalorder %s39, 1
        %s790 = scalar_select %p789, %s39, 1
        %s791 = smul.addr %s790, 4
        %s792 = smul.addr %s791, 4
        %s793 = scalar_lea.vmem %s3, %s792
        %p794 = scmp.lt.s32.totalorder %s39, 1
        %s795 = scalar_select %p794, %s39, 1
        %s796 = scalar_lea.vmem %s4, %s795
        %p797 = scmp.lt.s32.totalorder %s39, 1
        %s798 = scalar_select %p797, %s39, 1
        %s799 = smul.addr %s798, 4
        %s800 = smul.addr %s799, 4
        %s801 = scalar_lea.vmem %s5, %s800
        %p802 = scmp.lt.s32.totalorder %s39, 1
        %s803 = scalar_select %p802, %s39, 1
        %s804 = scalar_lea.vmem %s6, %s803
        %p805 = scmp.lt.s32.totalorder %s39, 1
        %s806 = scalar_select %p805, %s39, 1
        %s807 = smul.addr %s806, 4
        %s808 = smul.addr %s807, 4
        %s809 = scalar_lea.vmem %s7, %s808
        %p810 = scmp.lt.s32.totalorder %s39, 1
        %s811 = scalar_select %p810, %s39, 1
        %s812 = scalar_lea.vmem %s8, %s811
        %p813 = scmp.lt.s32.totalorder %s39, 1
        %s814 = scalar_select %p813, %s39, 1
        %s815 = smul.addr %s814, 4
        %s816 = smul.addr %s815, 4
        %s817 = scalar_lea.vmem %s9, %s816
        %p818 = scmp.lt.s32.totalorder %s39, 1
        %s819 = scalar_select %p818, %s39, 1
        %s820 = scalar_lea.vmem %s10, %s819
        %p821 = scmp.lt.s32.totalorder %s39, 1
        %s822 = scalar_select %p821, %s39, 1
        %s823 = scalar_lea.vmem %s11, %s822
        %p824 = scmp.lt.s32.totalorder %s39, 1
        %s825 = scalar_select %p824, %s39, 1
        %s826 = scalar_lea.vmem %s12, %s825
        %p827 = scmp.lt.s32.totalorder %s39, 1
        %s828 = scalar_select %p827, %s39, 1
        %s829 = smul.addr %s828, 4
        %s830 = smul.addr %s829, 4
        %s831 = scalar_lea.vmem %s13, %s830
        %p832 = scmp.lt.s32.totalorder %s39, 1
        %s833 = scalar_select %p832, %s39, 1
        %s834 = scalar_lea.vmem %s14, %s833
        %p835 = scmp.lt.s32.totalorder %s39, 1
        %s836 = scalar_select %p835, %s39, 1
        %s837 = smul.addr %s836, 16
        %s838 = smul.addr %s837, 4
        %s839 = scalar_lea.vmem %s15, %s838
        %p840 = scmp.lt.s32.totalorder %s39, 1
        %s841 = scalar_select %p840, %s39, 1
        %s842 = scalar_lea.vmem %s16, %s841
        %s843 = smul.u32 2, %s38
        %p845 = scmp.eq.s32.totalorder %s39, 0
        // Predicated region
        $region93: #{tpu_custom_call.1} parent=87 // pred_check
          %p846 = pneg %p845
        $region94: #{tpu_custom_call.1} parent=87 // pred_check_branch
          %848 = sbr.rel (%p846) target = $region96
        $region95: #{tpu_custom_call.1} parent=87 // pred_region
          %v849 = vld [vmem:[%s670] sm:$0xff]
          %v850 = vld [vmem:[%s670 + $0x8] sm:$0xff]
          %v851 = vld [vmem:[%s670 + $0x10] sm:$0xff]
          %v852 = vld [vmem:[%s670 + $0x18] sm:$0xff]
          %vm853 = vcmask 261120
          %854 = vst.msk [vmem:[%s781] sm:$0xff] %vm853, %v849
          %855 = vst.msk [vmem:[%s781 + $0x8] sm:$0xff] %vm853, %v850
          %856 = vst.msk [vmem:[%s781 + $0x10] sm:$0xff] %vm853, %v851
          %857 = vst.msk [vmem:[%s781 + $0x18] sm:$0xff] %vm853, %v852
        $region96: #{tpu_custom_call.1} parent=87 // pred_fallthru
          _
        %v858 = vld [vmem:[%s781] sm:$0xff]
        %v859 = vld [vmem:[%s781 + $0x8] sm:$0xff]
        %v860 = vld [vmem:[%s781 + $0x10] sm:$0xff]
        %v861 = vld [vmem:[%s781 + $0x18] sm:$0xff]
        %v862 = vld [vmem:[%s785] sm:$0x1]
        %v863 = vld [vmem:[%s788] sm:$0x1]
        %vm864 = vcmask 261120
        %v865 = vsel %vm864, %v858, 0.0
        %866 = vadd.xlane.f32.xlu0 %v865
        %v867 = vpop.xlane.xlu0 %866
        %v868 = vsel %vm864, %v859, 0.0
        %869 = vadd.xlane.f32.xlu0 %v868
        %v870 = vpop.xlane.xlu0 %869
        %v871 = vsel %vm864, %v860, 0.0
        %872 = vadd.xlane.f32.xlu0 %v871
        %v873 = vpop.xlane.xlu0 %872
        %v874 = vsel %vm864, %v861, 0.0
        %875 = vadd.xlane.f32.xlu0 %v874
        %v876 = vpop.xlane.xlu0 %875
        %v877 = vrcp.pop 32.0
        %v878 = vmul.f32 32.0, %v877
        %v879 = vsub.f32 1.0, %v878
        %v880 = vmul.f32 %v877, %v879
        %v881 = vadd.f32 %v877, %v880
        %vm882 = vweird.f32 %v877
        %v883 = vsel %vm882, %v877, %v881
        %v884 = vmul.f32 %v867, %v883
        %v885 = vmul.f32 %v870, %v883
        %v886 = vmul.f32 %v873, %v883
        %v887 = vmul.f32 %v876, %v883
        %v888 = vsub.f32 %v858, %v884
        %v889 = vsub.f32 %v859, %v885
        %v890 = vsub.f32 %v860, %v886
        %v891 = vsub.f32 %v861, %v887
        %v892 = vmul.f32 %v888, %v888
        %v893 = vmul.f32 %v889, %v889
        %v894 = vmul.f32 %v890, %v890
        %v895 = vmul.f32 %v891, %v891
        %v896 = vsel %vm864, %v892, 0.0
        %897 = vadd.xlane.f32.xlu0 %v896
        %v898 = vpop.xlane.xlu0 %897
        %v899 = vsel %vm864, %v893, 0.0
        %900 = vadd.xlane.f32.xlu0 %v899
        %v901 = vpop.xlane.xlu0 %900
        %v902 = vsel %vm864, %v894, 0.0
        %903 = vadd.xlane.f32.xlu0 %v902
        %v904 = vpop.xlane.xlu0 %903
        %v905 = vsel %vm864, %v895, 0.0
        %906 = vadd.xlane.f32.xlu0 %v905
        %v907 = vpop.xlane.xlu0 %906
        %v908 = vmul.f32 %v898, %v883
        %v909 = vmul.f32 %v901, %v883
        %v910 = vmul.f32 %v904, %v883
        %v911 = vmul.f32 %v907, %v883
        %v912 = vadd.f32 %v908, 1e-06
        %v913 = vadd.f32 %v909, 1e-06
        %v914 = vadd.f32 %v910, 1e-06
        %v915 = vadd.f32 %v911, 1e-06
        %v916 = vrsqrt.pop %v912
        %v917 = vmul.f32 %v916, %v912
        %v918 = vmul.f32 %v917, %v916
        %v919 = vmul.f32 0.5, %v918
        %v920 = vsub.f32 1.5, %v919
        %v921 = vmul.f32 %v916, %v920
        %vm922 = vweird.f32 %v912
        %vm923 = vweird.f32 %v916
        %vm924 = vmor %vm922, %vm923
        %v925 = vsel %vm924, %v916, %v921
        %v926 = vrsqrt.pop %v913
        %v927 = vmul.f32 %v926, %v913
        %v928 = vmul.f32 %v927, %v926
        %v929 = vmul.f32 0.5, %v928
        %v930 = vsub.f32 1.5, %v929
        %v931 = vmul.f32 %v926, %v930
        %vm932 = vweird.f32 %v913
        %vm933 = vweird.f32 %v926
        %vm934 = vmor %vm932, %vm933
        %v935 = vsel %vm934, %v926, %v931
        %v936 = vrsqrt.pop %v914
        %v937 = vmul.f32 %v936, %v914
        %v938 = vmul.f32 %v937, %v936
        %v939 = vmul.f32 0.5, %v938
        %v940 = vsub.f32 1.5, %v939
        %v941 = vmul.f32 %v936, %v940
        %vm942 = vweird.f32 %v914
        %vm943 = vweird.f32 %v936
        %vm944 = vmor %vm942, %vm943
        %v945 = vsel %vm944, %v936, %v941
        %v946 = vrsqrt.pop %v915
        %v947 = vmul.f32 %v946, %v915
        %v948 = vmul.f32 %v947, %v946
        %v949 = vmul.f32 0.5, %v948
        %v950 = vsub.f32 1.5, %v949
        %v951 = vmul.f32 %v946, %v950
        %vm952 = vweird.f32 %v915
        %vm953 = vweird.f32 %v946
        %vm954 = vmor %vm952, %vm953
        %v955 = vsel %vm954, %v946, %v951
        %v956 = vmul.f32 %v888, %v925
        %v957 = vmul.f32 %v889, %v935
        %v958 = vmul.f32 %v890, %v945
        %v959 = vmul.f32 %v891, %v955
        %v961 = vperm.slane %v862, 0
        %v963 = vmul.f32 %v956, %v961
        %v964 = vmul.f32 %v957, %v961
        %v965 = vmul.f32 %v958, %v961
        %v966 = vmul.f32 %v959, %v961
        %v968 = vperm.slane %v863, 0
        %v970 = vadd.f32 %v963, %v968
        %v971 = vadd.f32 %v964, %v968
        %v972 = vadd.f32 %v965, %v968
        %v973 = vadd.f32 %v966, %v968
        %v974 = vpack.c.bf16 %v971, %v970
        %v975 = vpack.c.bf16 %v973, %v972
        %v976 = vld [vmem:[%s793] sm:$0xf]
        %v977 = vld [vmem:[%s793 + $0x4] sm:$0xf]
        %v978 = vld [vmem:[%s793 + $0x8] sm:$0xf]
        %v979 = vld [vmem:[%s793 + $0xc] sm:$0xf]
        %v980 = vld [vmem:[%s796] sm:$0x1]
        %v982 = vperm.slane %v980, 0
        %v988 = vunpack.c.l.b16 %v976
        %v989 = vunpack.c.l.b16 %v977
        %v990 = vunpack.c.l.b16 %v978
        %v991 = vunpack.c.l.b16 %v979
        %v992 = vpack.c.b16 %v989, %v988
        %v993 = vpack.c.b16 %v991, %v990
        %v997 = vsel %vm864, %v974, 0
        %v1000 = vsel %vm864, %v975, 0
        %1002 = vmatpush.bf16.msra.mxu0 0
        %1003 = vmatpush.bf16.msra.mxu0 0
        %1004 = vmatpush.bf16.msra.mxu0 0
        %1005 = vmatpush.bf16.msra.mxu0 0
        %1006 = vmatpush.bf16.msra.mxu0 0
        %1007 = vmatpush.bf16.msra.mxu0 0
        %1008 = vmatpush.bf16.msra.mxu0 %v993
        %1009 = vmatpush.bf16.msra.mxu0 %v992
        %1010 = vmatmul.bf16.gmra.mxu0 %v997
        %v1011 = vpop.f32.mrf.mxu0
        %v1012 = vadd.f32 %v982, %v1011
        %v1013 = vpop.f32.mrf.mxu0
        %v1014 = vadd.f32 %v982, %v1013
        %1015 = vmatmul.bf16.gmra.mxu0 %v1000
        %v1016 = vpop.f32.mrf.mxu0
        %v1017 = vadd.f32 %v982, %v1016
        %v1018 = vpop.f32.mrf.mxu0
        %v1019 = vadd.f32 %v982, %v1018
        %1020 = vdwg.mxu0
        %v1021 = vpack.c.bf16 %v1012, %v1012
        %v1022 = vpack.c.bf16 %v1014, %v1014
        %v1023 = vpack.c.bf16 %v1017, %v1017
        %v1024 = vpack.c.bf16 %v1019, %v1019
        %v1025 = vld [vmem:[%s801] sm:$0xf]
        %v1026 = vld [vmem:[%s801 + $0x4] sm:$0xf]
        %v1027 = vld [vmem:[%s801 + $0x8] sm:$0xf]
        %v1028 = vld [vmem:[%s801 + $0xc] sm:$0xf]
        %v1029 = vld [vmem:[%s804] sm:$0x1]
        %v1031 = vperm.slane %v1029, 0
        %v1037 = vunpack.c.l.b16 %v1025
        %v1038 = vunpack.c.l.b16 %v1026
        %v1039 = vunpack.c.l.b16 %v1027
        %v1040 = vunpack.c.l.b16 %v1028
        %v1041 = vpack.c.b16 %v1038, %v1037
        %v1042 = vpack.c.b16 %v1040, %v1039
        %1045 = vmatpush.bf16.msra.mxu0 0
        %1046 = vmatpush.bf16.msra.mxu0 0
        %1047 = vmatpush.bf16.msra.mxu0 0
        %1048 = vmatpush.bf16.msra.mxu0 0
        %1049 = vmatpush.bf16.msra.mxu0 0
        %1050 = vmatpush.bf16.msra.mxu0 0
        %1051 = vmatpush.bf16.msra.mxu0 %v1042
        %1052 = vmatpush.bf16.msra.mxu0 %v1041
        %1053 = vmatmul.bf16.gmra.mxu0 %v997
        %v1054 = vpop.f32.mrf.mxu0
        %v1055 = vadd.f32 %v1031, %v1054
        %v1056 = vpop.f32.mrf.mxu0
        %v1057 = vadd.f32 %v1031, %v1056
        %1058 = vmatmul.bf16.gmra.mxu0 %v1000
        %v1059 = vpop.f32.mrf.mxu0
        %v1060 = vadd.f32 %v1031, %v1059
        %v1061 = vpop.f32.mrf.mxu0
        %v1062 = vadd.f32 %v1031, %v1061
        %1063 = vdwg.mxu0
        %v1064 = vpack.c.bf16 %v1055, %v1055
        %v1065 = vpack.c.bf16 %v1057, %v1057
        %v1066 = vpack.c.bf16 %v1060, %v1060
        %v1067 = vpack.c.bf16 %v1062, %v1062
        %v1068 = vld [vmem:[%s809] sm:$0xf]
        %v1069 = vld [vmem:[%s809 + $0x4] sm:$0xf]
        %v1070 = vld [vmem:[%s809 + $0x8] sm:$0xf]
        %v1071 = vld [vmem:[%s809 + $0xc] sm:$0xf]
        %v1072 = vld [vmem:[%s812] sm:$0x1]
        %v1074 = vperm.slane %v1072, 0
        %v1080 = vunpack.c.l.b16 %v1068
        %v1081 = vunpack.c.l.b16 %v1069
        %v1082 = vunpack.c.l.b16 %v1070
        %v1083 = vunpack.c.l.b16 %v1071
        %v1084 = vpack.c.b16 %v1081, %v1080
        %v1085 = vpack.c.b16 %v1083, %v1082
        %1088 = vmatpush.bf16.msra.mxu0 0
        %1089 = vmatpush.bf16.msra.mxu0 0
        %1090 = vmatpush.bf16.msra.mxu0 0
        %1091 = vmatpush.bf16.msra.mxu0 0
        %1092 = vmatpush.bf16.msra.mxu0 0
        %1093 = vmatpush.bf16.msra.mxu0 0
        %1094 = vmatpush.bf16.msra.mxu0 %v1085
        %1095 = vmatpush.bf16.msra.mxu0 %v1084
        %1096 = vmatmul.bf16.gmra.mxu0 %v997
        %v1097 = vpop.f32.mrf.mxu0
        %v1098 = vadd.f32 %v1074, %v1097
        %v1099 = vpop.f32.mrf.mxu0
        %v1100 = vadd.f32 %v1074, %v1099
        %1101 = vmatmul.bf16.gmra.mxu0 %v1000
        %v1102 = vpop.f32.mrf.mxu0
        %v1103 = vadd.f32 %v1074, %v1102
        %v1104 = vpop.f32.mrf.mxu0
        %v1105 = vadd.f32 %v1074, %v1104
        %1106 = vdwg.mxu0
        %v1107 = vpack.c.bf16 %v1098, %v1098
        %v1108 = vpack.c.bf16 %v1100, %v1100
        %v1109 = vpack.c.bf16 %v1103, %v1103
        %v1110 = vpack.c.bf16 %v1105, %v1105
        %v1113 = vunpack.c.l.b16 %v1021
        %v1114 = vunpack.c.l.b16 %v1022
        %v1115 = vpack.c.b16 %v1114, %v1113
        %v1118 = vunpack.c.l.b16 %v1064
        %v1119 = vunpack.c.l.b16 %v1065
        %v1120 = vpack.c.b16 %v1119, %v1118
        %vm1121 = vcmask 64512
        %v1123 = vsel %vm1121, %v1115, 0
        %v1126 = vsel %vm1121, %v1120, 0
        %1128 = vmatpush.bf16.xpose.msra.mxu0 0
        %1129 = vmatpush.bf16.xpose.msra.mxu0 0
        %1130 = vmatpush.bf16.xpose.msra.mxu0 0
        %1131 = vmatpush.bf16.xpose.msra.mxu0 0
        %1132 = vmatpush.bf16.xpose.msra.mxu0 0
        %1133 = vmatpush.bf16.xpose.msra.mxu0 0
        %1134 = vmatpush.bf16.xpose.msra.mxu0 0
        %1135 = vmatpush.bf16.xpose.msra.mxu0 %v1126
        %1136 = vmatmul.bf16.gmra.mxu0 %v1123
        %v1137 = vpop.f32.mrf.mxu0
        %v1138 = vadd.f32 0.0, %v1137
        %v1139 = vpop.f32.mrf.mxu0
        %v1140 = vadd.f32 0.0, %v1139
        %1141 = vdwg.mxu0
        %v1144 = vunpack.c.l.b16 %v1023
        %v1145 = vunpack.c.l.b16 %v1024
        %v1146 = vpack.c.b16 %v1145, %v1144
        %v1149 = vunpack.c.l.b16 %v1066
        %v1150 = vunpack.c.l.b16 %v1067
        %v1151 = vpack.c.b16 %v1150, %v1149
        %v1153 = vsel %vm1121, %v1146, 0
        %v1156 = vsel %vm1121, %v1151, 0
        %1158 = vmatpush.bf16.xpose.msra.mxu0 0
        %1159 = vmatpush.bf16.xpose.msra.mxu0 0
        %1160 = vmatpush.bf16.xpose.msra.mxu0 0
        %1161 = vmatpush.bf16.xpose.msra.mxu0 0
        %1162 = vmatpush.bf16.xpose.msra.mxu0 0
        %1163 = vmatpush.bf16.xpose.msra.mxu0 0
        %1164 = vmatpush.bf16.xpose.msra.mxu0 0
        %1165 = vmatpush.bf16.xpose.msra.mxu0 %v1156
        %1166 = vmatmul.bf16.gmra.mxu0 %v1153
        %v1167 = vpop.f32.mrf.mxu0
        %v1168 = vadd.f32 0.0, %v1167
        %v1169 = vpop.f32.mrf.mxu0
        %v1170 = vadd.f32 0.0, %v1169
        %1171 = vdwg.mxu0
        %v1172 = vmul.f32 %v1138, 0.35355338
        %v1173 = vmul.f32 %v1140, 0.35355338
        %v1174 = vmul.f32 %v1168, 0.35355338
        %v1175 = vmul.f32 %v1170, 0.35355338
        %vm1176 = vcmask 130048
        %v1177 = vsel %vm1176, %v1172, -inf
        %1178 = vmax.xlane.f32.xlu0 %v1177
        %v1179 = vpop.xlane.xlu0 %1178
        %v1180 = vsel %vm1176, %v1173, -inf
        %1181 = vmax.xlane.f32.xlu0 %v1180
        %v1182 = vpop.xlane.xlu0 %1181
        %v1183 = vsel %vm1176, %v1174, -inf
        %1184 = vmax.xlane.f32.xlu0 %v1183
        %v1185 = vpop.xlane.xlu0 %1184
        %v1186 = vsel %vm1176, %v1175, -inf
        %1187 = vmax.xlane.f32.xlu0 %v1186
        %v1188 = vpop.xlane.xlu0 %1187
        %v1189 = vsub.f32 %v1172, %v1179
        %v1190 = vsub.f32 %v1173, %v1182
        %v1191 = vsub.f32 %v1174, %v1185
        %v1192 = vsub.f32 %v1175, %v1188
        %v1193 = vmul.f32 %v1189, 1.442695
        %v1194 = vpow.pop %v1193
        %v1195 = vmul.f32 %v1190, 1.442695
        %v1196 = vpow.pop %v1195
        %v1197 = vmul.f32 %v1191, 1.442695
        %v1198 = vpow.pop %v1197
        %v1199 = vmul.f32 %v1192, 1.442695
        %v1200 = vpow.pop %v1199
        %v1201 = vsel %vm1176, %v1194, 0.0
        %1202 = vadd.xlane.f32.xlu0 %v1201
        %v1203 = vpop.xlane.xlu0 %1202
        %v1204 = vsel %vm1176, %v1196, 0.0
        %1205 = vadd.xlane.f32.xlu0 %v1204
        %v1206 = vpop.xlane.xlu0 %1205
        %v1207 = vsel %vm1176, %v1198, 0.0
        %1208 = vadd.xlane.f32.xlu0 %v1207
        %v1209 = vpop.xlane.xlu0 %1208
        %v1210 = vsel %vm1176, %v1200, 0.0
        %1211 = vadd.xlane.f32.xlu0 %v1210
        %v1212 = vpop.xlane.xlu0 %1211
        %v1213 = vrcp.pop %v1203
        %v1214 = vrcp.pop %v1206
        %v1215 = vrcp.pop %v1209
        %v1216 = vrcp.pop %v1212
        %v1217 = vmul.f32 %v1194, %v1213
        %v1218 = vmul.f32 %v1196, %v1214
        %v1219 = vmul.f32 %v1198, %v1215
        %v1220 = vmul.f32 %v1200, %v1216
        %v1221 = vpack.c.bf16 %v1217, %v1217
        %v1222 = vpack.c.bf16 %v1218, %v1218
        %v1223 = vpack.c.bf16 %v1219, %v1219
        %v1224 = vpack.c.bf16 %v1220, %v1220
        %v1227 = vunpack.c.l.b16 %v1221
        %v1228 = vunpack.c.l.b16 %v1222
        %v1229 = vpack.c.b16 %v1228, %v1227
        %v1232 = vunpack.c.l.b16 %v1107
        %v1233 = vunpack.c.l.b16 %v1108
        %v1234 = vpack.c.b16 %v1233, %v1232
        %v1237 = vsel %vm1176, %v1229, 0
        %1239 = vmatpush.bf16.msra.mxu0 0
        %1240 = vmatpush.bf16.msra.mxu0 0
        %1241 = vmatpush.bf16.msra.mxu0 0
        %1242 = vmatpush.bf16.msra.mxu0 0
        %1243 = vmatpush.bf16.msra.mxu0 0
        %1244 = vmatpush.bf16.msra.mxu0 0
        %1245 = vmatpush.bf16.msra.mxu0 0
        %1246 = vmatpush.bf16.msra.mxu0 %v1234
        %1247 = vmatmul.bf16.gmra.mxu0 %v1237
        %v1248 = vpop.f32.mrf.mxu0
        %v1249 = vadd.f32 0.0, %v1248
        %v1250 = vpop.f32.mrf.mxu0
        %v1251 = vadd.f32 0.0, %v1250
        %1252 = vdwg.mxu0
        %v1255 = vunpack.c.l.b16 %v1223
        %v1256 = vunpack.c.l.b16 %v1224
        %v1257 = vpack.c.b16 %v1256, %v1255
        %v1260 = vunpack.c.l.b16 %v1109
        %v1261 = vunpack.c.l.b16 %v1110
        %v1262 = vpack.c.b16 %v1261, %v1260
        %v1265 = vsel %vm1176, %v1257, 0
        %1267 = vmatpush.bf16.msra.mxu0 0
        %1268 = vmatpush.bf16.msra.mxu0 0
        %1269 = vmatpush.bf16.msra.mxu0 0
        %1270 = vmatpush.bf16.msra.mxu0 0
        %1271 = vmatpush.bf16.msra.mxu0 0
        %1272 = vmatpush.bf16.msra.mxu0 0
        %1273 = vmatpush.bf16.msra.mxu0 0
        %1274 = vmatpush.bf16.msra.mxu0 %v1262
        %1275 = vmatmul.bf16.gmra.mxu0 %v1265
        %v1276 = vpop.f32.mrf.mxu0
        %v1277 = vadd.f32 0.0, %v1276
        %v1278 = vpop.f32.mrf.mxu0
        %v1279 = vadd.f32 0.0, %v1278
        %1280 = vdwg.mxu0
        %v1281 = vpack.c.bf16 %v1249, %v1249
        %v1282 = vpack.c.bf16 %v1251, %v1251
        %v1283 = vpack.c.bf16 %v1277, %v1277
        %v1284 = vpack.c.bf16 %v1279, %v1279
        %vm1285 = vcmask 60416
        %1286 = vst.msk [vmem:[#allocation2] sm:$0xf] %vm1285, %v1281
        %1287 = vst.msk [vmem:[#allocation2 + $0x4] sm:$0xf] %vm1285, %v1282
        %1288 = vst.msk [vmem:[#allocation2 + $0x8] sm:$0xf] %vm1285, %v1283
        %1289 = vst.msk [vmem:[#allocation2 + $0xc] sm:$0xf] %vm1285, %v1284
        %1290 = vrot.lane.b32.xlu0 %v1115, 120
        %v1291 = vpop.permute.xlu0 %1290
        %1292 = vrot.lane.b32.xlu0 %v1120, 120
        %v1293 = vpop.permute.xlu0 %1292
        %v1295 = vsel %vm1121, %v1291, 0
        %v1298 = vsel %vm1121, %v1293, 0
        %1300 = vmatpush.bf16.xpose.msra.mxu0 0
        %1301 = vmatpush.bf16.xpose.msra.mxu0 0
        %1302 = vmatpush.bf16.xpose.msra.mxu0 0
        %1303 = vmatpush.bf16.xpose.msra.mxu0 0
        %1304 = vmatpush.bf16.xpose.msra.mxu0 0
        %1305 = vmatpush.bf16.xpose.msra.mxu0 0
        %1306 = vmatpush.bf16.xpose.msra.mxu0 0
        %1307 = vmatpush.bf16.xpose.msra.mxu0 %v1298
        %1308 = vmatmul.bf16.gmra.mxu0 %v1295
        %v1309 = vpop.f32.mrf.mxu0
        %v1310 = vadd.f32 0.0, %v1309
        %v1311 = vpop.f32.mrf.mxu0
        %v1312 = vadd.f32 0.0, %v1311
        %1313 = vdwg.mxu0
        %1314 = vrot.lane.b32.xlu0 %v1146, 120
        %v1315 = vpop.permute.xlu0 %1314
        %1316 = vrot.lane.b32.xlu0 %v1151, 120
        %v1317 = vpop.permute.xlu0 %1316
        %v1319 = vsel %vm1121, %v1315, 0
        %v1322 = vsel %vm1121, %v1317, 0
        %1324 = vmatpush.bf16.xpose.msra.mxu0 0
        %1325 = vmatpush.bf16.xpose.msra.mxu0 0
        %1326 = vmatpush.bf16.xpose.msra.mxu0 0
        %1327 = vmatpush.bf16.xpose.msra.mxu0 0
        %1328 = vmatpush.bf16.xpose.msra.mxu0 0
        %1329 = vmatpush.bf16.xpose.msra.mxu0 0
        %1330 = vmatpush.bf16.xpose.msra.mxu0 0
        %1331 = vmatpush.bf16.xpose.msra.mxu0 %v1322
        %1332 = vmatmul.bf16.gmra.mxu0 %v1319
        %v1333 = vpop.f32.mrf.mxu0
        %v1334 = vadd.f32 0.0, %v1333
        %v1335 = vpop.f32.mrf.mxu0
        %v1336 = vadd.f32 0.0, %v1335
        %1337 = vdwg.mxu0
        %v1338 = vmul.f32 %v1310, 0.35355338
        %v1339 = vmul.f32 %v1312, 0.35355338
        %v1340 = vmul.f32 %v1334, 0.35355338
        %v1341 = vmul.f32 %v1336, 0.35355338
        %v1342 = vsel %vm1176, %v1338, -inf
        %1343 = vmax.xlane.f32.xlu0 %v1342
        %v1344 = vpop.xlane.xlu0 %1343
        %v1345 = vsel %vm1176, %v1339, -inf
        %1346 = vmax.xlane.f32.xlu0 %v1345
        %v1347 = vpop.xlane.xlu0 %1346
        %v1348 = vsel %vm1176, %v1340, -inf
        %1349 = vmax.xlane.f32.xlu0 %v1348
        %v1350 = vpop.xlane.xlu0 %1349
        %v1351 = vsel %vm1176, %v1341, -inf
        %1352 = vmax.xlane.f32.xlu0 %v1351
        %v1353 = vpop.xlane.xlu0 %1352
        %v1354 = vsub.f32 %v1338, %v1344
        %v1355 = vsub.f32 %v1339, %v1347
        %v1356 = vsub.f32 %v1340, %v1350
        %v1357 = vsub.f32 %v1341, %v1353
        %v1358 = vmul.f32 %v1354, 1.442695
        %v1359 = vpow.pop %v1358
        %v1360 = vmul.f32 %v1355, 1.442695
        %v1361 = vpow.pop %v1360
        %v1362 = vmul.f32 %v1356, 1.442695
        %v1363 = vpow.pop %v1362
        %v1364 = vmul.f32 %v1357, 1.442695
        %v1365 = vpow.pop %v1364
        %v1366 = vsel %vm1176, %v1359, 0.0
        %1367 = vadd.xlane.f32.xlu0 %v1366
        %v1368 = vpop.xlane.xlu0 %1367
        %v1369 = vsel %vm1176, %v1361, 0.0
        %1370 = vadd.xlane.f32.xlu0 %v1369
        %v1371 = vpop.xlane.xlu0 %1370
        %v1372 = vsel %vm1176, %v1363, 0.0
        %1373 = vadd.xlane.f32.xlu0 %v1372
        %v1374 = vpop.xlane.xlu0 %1373
        %v1375 = vsel %vm1176, %v1365, 0.0
        %1376 = vadd.xlane.f32.xlu0 %v1375
        %v1377 = vpop.xlane.xlu0 %1376
        %v1378 = vrcp.pop %v1368
        %v1379 = vrcp.pop %v1371
        %v1380 = vrcp.pop %v1374
        %v1381 = vrcp.pop %v1377
        %v1382 = vmul.f32 %v1359, %v1378
        %v1383 = vmul.f32 %v1361, %v1379
        %v1384 = vmul.f32 %v1363, %v1380
        %v1385 = vmul.f32 %v1365, %v1381
        %v1386 = vpack.c.bf16 %v1382, %v1382
        %v1387 = vpack.c.bf16 %v1383, %v1383
        %v1388 = vpack.c.bf16 %v1384, %v1384
        %v1389 = vpack.c.bf16 %v1385, %v1385
        %v1392 = vunpack.c.l.b16 %v1386
        %v1393 = vunpack.c.l.b16 %v1387
        %v1394 = vpack.c.b16 %v1393, %v1392
        %1395 = vrot.lane.b32.xlu0 %v1234, 120
        %v1396 = vpop.permute.xlu0 %1395
        %v1399 = vsel %vm1176, %v1394, 0
        %1401 = vmatpush.bf16.msra.mxu0 0
        %1402 = vmatpush.bf16.msra.mxu0 0
        %1403 = vmatpush.bf16.msra.mxu0 0
        %1404 = vmatpush.bf16.msra.mxu0 0
        %1405 = vmatpush.bf16.msra.mxu0 0
        %1406 = vmatpush.bf16.msra.mxu0 0
        %1407 = vmatpush.bf16.msra.mxu0 0
        %1408 = vmatpush.bf16.msra.mxu0 %v1396
        %1409 = vmatmul.bf16.gmra.mxu0 %v1399
        %v1410 = vpop.f32.mrf.mxu0
        %v1411 = vadd.f32 0.0, %v1410
        %v1412 = vpop.f32.mrf.mxu0
        %v1413 = vadd.f32 0.0, %v1412
        %1414 = vdwg.mxu0
        %v1417 = vunpack.c.l.b16 %v1388
        %v1418 = vunpack.c.l.b16 %v1389
        %v1419 = vpack.c.b16 %v1418, %v1417
        %1420 = vrot.lane.b32.xlu0 %v1262, 120
        %v1421 = vpop.permute.xlu0 %1420
        %v1424 = vsel %vm1176, %v1419, 0
        %1426 = vmatpush.bf16.msra.mxu0 0
        %1427 = vmatpush.bf16.msra.mxu0 0
        %1428 = vmatpush.bf16.msra.mxu0 0
        %1429 = vmatpush.bf16.msra.mxu0 0
        %1430 = vmatpush.bf16.msra.mxu0 0
        %1431 = vmatpush.bf16.msra.mxu0 0
        %1432 = vmatpush.bf16.msra.mxu0 0
        %1433 = vmatpush.bf16.msra.mxu0 %v1421
        %1434 = vmatmul.bf16.gmra.mxu0 %v1424
        %v1435 = vpop.f32.mrf.mxu0
        %v1436 = vadd.f32 0.0, %v1435
        %v1437 = vpop.f32.mrf.mxu0
        %v1438 = vadd.f32 0.0, %v1437
        %1439 = vdwg.mxu0
        %v1440 = vpack.c.bf16 %v1411, %v1411
        %v1441 = vpack.c.bf16 %v1413, %v1413
        %v1442 = vpack.c.bf16 %v1436, %v1436
        %v1443 = vpack.c.bf16 %v1438, %v1438
        %1448 = vrot.lane.b32.xlu0 %v1440, 8
        %v1449 = vpop.permute.xlu0 %1448
        %1450 = vrot.lane.b32.xlu0 %v1441, 8
        %v1451 = vpop.permute.xlu0 %1450
        %1452 = vrot.lane.b32.xlu0 %v1442, 8
        %v1453 = vpop.permute.xlu0 %1452
        %1454 = vrot.lane.b32.xlu0 %v1443, 8
        %v1455 = vpop.permute.xlu0 %1454
        %vm1460 = vcmask 126016
        %1461 = vst.msk [vmem:[#allocation2] sm:$0xf] %vm1460, %v1449
        %1462 = vst.msk [vmem:[#allocation2 + $0x4] sm:$0xf] %vm1460, %v1451
        %1463 = vst.msk [vmem:[#allocation2 + $0x8] sm:$0xf] %vm1460, %v1453
        %1464 = vst.msk [vmem:[#allocation2 + $0xc] sm:$0xf] %vm1460, %v1455
        %1465 = vrot.lane.b32.xlu0 %v1115, 112
        %v1466 = vpop.permute.xlu0 %1465
        %1467 = vrot.lane.b32.xlu0 %v1120, 112
        %v1468 = vpop.permute.xlu0 %1467
        %v1470 = vsel %vm1121, %v1466, 0
        %v1473 = vsel %vm1121, %v1468, 0
        %1475 = vmatpush.bf16.xpose.msra.mxu0 0
        %1476 = vmatpush.bf16.xpose.msra.mxu0 0
        %1477 = vmatpush.bf16.xpose.msra.mxu0 0
        %1478 = vmatpush.bf16.xpose.msra.mxu0 0
        %1479 = vmatpush.bf16.xpose.msra.mxu0 0
        %1480 = vmatpush.bf16.xpose.msra.mxu0 0
        %1481 = vmatpush.bf16.xpose.msra.mxu0 0
        %1482 = vmatpush.bf16.xpose.msra.mxu0 %v1473
        %1483 = vmatmul.bf16.gmra.mxu0 %v1470
        %v1484 = vpop.f32.mrf.mxu0
        %v1485 = vadd.f32 0.0, %v1484
        %v1486 = vpop.f32.mrf.mxu0
        %v1487 = vadd.f32 0.0, %v1486
        %1488 = vdwg.mxu0
        %1489 = vrot.lane.b32.xlu0 %v1146, 112
        %v1490 = vpop.permute.xlu0 %1489
        %1491 = vrot.lane.b32.xlu0 %v1151, 112
        %v1492 = vpop.permute.xlu0 %1491
        %v1494 = vsel %vm1121, %v1490, 0
        %v1497 = vsel %vm1121, %v1492, 0
        %1499 = vmatpush.bf16.xpose.msra.mxu0 0
        %1500 = vmatpush.bf16.xpose.msra.mxu0 0
        %1501 = vmatpush.bf16.xpose.msra.mxu0 0
        %1502 = vmatpush.bf16.xpose.msra.mxu0 0
        %1503 = vmatpush.bf16.xpose.msra.mxu0 0
        %1504 = vmatpush.bf16.xpose.msra.mxu0 0
        %1505 = vmatpush.bf16.xpose.msra.mxu0 0
        %1506 = vmatpush.bf16.xpose.msra.mxu0 %v1497
        %1507 = vmatmul.bf16.gmra.mxu0 %v1494
        %v1508 = vpop.f32.mrf.mxu0
        %v1509 = vadd.f32 0.0, %v1508
        %v1510 = vpop.f32.mrf.mxu0
        %v1511 = vadd.f32 0.0, %v1510
        %1512 = vdwg.mxu0
        %v1513 = vmul.f32 %v1485, 0.35355338
        %v1514 = vmul.f32 %v1487, 0.35355338
        %v1515 = vmul.f32 %v1509, 0.35355338
        %v1516 = vmul.f32 %v1511, 0.35355338
        %v1517 = vsel %vm1176, %v1513, -inf
        %1518 = vmax.xlane.f32.xlu0 %v1517
        %v1519 = vpop.xlane.xlu0 %1518
        %v1520 = vsel %vm1176, %v1514, -inf
        %1521 = vmax.xlane.f32.xlu0 %v1520
        %v1522 = vpop.xlane.xlu0 %1521
        %v1523 = vsel %vm1176, %v1515, -inf
        %1524 = vmax.xlane.f32.xlu0 %v1523
        %v1525 = vpop.xlane.xlu0 %1524
        %v1526 = vsel %vm1176, %v1516, -inf
        %1527 = vmax.xlane.f32.xlu0 %v1526
        %v1528 = vpop.xlane.xlu0 %1527
        %v1529 = vsub.f32 %v1513, %v1519
        %v1530 = vsub.f32 %v1514, %v1522
        %v1531 = vsub.f32 %v1515, %v1525
        %v1532 = vsub.f32 %v1516, %v1528
        %v1533 = vmul.f32 %v1529, 1.442695
        %v1534 = vpow.pop %v1533
        %v1535 = vmul.f32 %v1530, 1.442695
        %v1536 = vpow.pop %v1535
        %v1537 = vmul.f32 %v1531, 1.442695
        %v1538 = vpow.pop %v1537
        %v1539 = vmul.f32 %v1532, 1.442695
        %v1540 = vpow.pop %v1539
        %v1541 = vsel %vm1176, %v1534, 0.0
        %1542 = vadd.xlane.f32.xlu0 %v1541
        %v1543 = vpop.xlane.xlu0 %1542
        %v1544 = vsel %vm1176, %v1536, 0.0
        %1545 = vadd.xlane.f32.xlu0 %v1544
        %v1546 = vpop.xlane.xlu0 %1545
        %v1547 = vsel %vm1176, %v1538, 0.0
        %1548 = vadd.xlane.f32.xlu0 %v1547
        %v1549 = vpop.xlane.xlu0 %1548
        %v1550 = vsel %vm1176, %v1540, 0.0
        %1551 = vadd.xlane.f32.xlu0 %v1550
        %v1552 = vpop.xlane.xlu0 %1551
        %v1553 = vrcp.pop %v1543
        %v1554 = vrcp.pop %v1546
        %v1555 = vrcp.pop %v1549
        %v1556 = vrcp.pop %v1552
        %v1557 = vmul.f32 %v1534, %v1553
        %v1558 = vmul.f32 %v1536, %v1554
        %v1559 = vmul.f32 %v1538, %v1555
        %v1560 = vmul.f32 %v1540, %v1556
        %v1561 = vpack.c.bf16 %v1557, %v1557
        %v1562 = vpack.c.bf16 %v1558, %v1558
        %v1563 = vpack.c.bf16 %v1559, %v1559
        %v1564 = vpack.c.bf16 %v1560, %v1560
        %v1567 = vunpack.c.l.b16 %v1561
        %v1568 = vunpack.c.l.b16 %v1562
        %v1569 = vpack.c.b16 %v1568, %v1567
        %1570 = vrot.lane.b32.xlu0 %v1234, 112
        %v1571 = vpop.permute.xlu0 %1570
        %v1574 = vsel %vm1176, %v1569, 0
        %1576 = vmatpush.bf16.msra.mxu0 0
        %1577 = vmatpush.bf16.msra.mxu0 0
        %1578 = vmatpush.bf16.msra.mxu0 0
        %1579 = vmatpush.bf16.msra.mxu0 0
        %1580 = vmatpush.bf16.msra.mxu0 0
        %1581 = vmatpush.bf16.msra.mxu0 0
        %1582 = vmatpush.bf16.msra.mxu0 0
        %1583 = vmatpush.bf16.msra.mxu0 %v1571
        %1584 = vmatmul.bf16.gmra.mxu0 %v1574
        %v1585 = vpop.f32.mrf.mxu0
        %v1586 = vadd.f32 0.0, %v1585
        %v1587 = vpop.f32.mrf.mxu0
        %v1588 = vadd.f32 0.0, %v1587
        %1589 = vdwg.mxu0
        %v1592 = vunpack.c.l.b16 %v1563
        %v1593 = vunpack.c.l.b16 %v1564
        %v1594 = vpack.c.b16 %v1593, %v1592
        %1595 = vrot.lane.b32.xlu0 %v1262, 112
        %v1596 = vpop.permute.xlu0 %1595
        %v1599 = vsel %vm1176, %v1594, 0
        %1601 = vmatpush.bf16.msra.mxu0 0
        %1602 = vmatpush.bf16.msra.mxu0 0
        %1603 = vmatpush.bf16.msra.mxu0 0
        %1604 = vmatpush.bf16.msra.mxu0 0
        %1605 = vmatpush.bf16.msra.mxu0 0
        %1606 = vmatpush.bf16.msra.mxu0 0
        %1607 = vmatpush.bf16.msra.mxu0 0
        %1608 = vmatpush.bf16.msra.mxu0 %v1596
        %1609 = vmatmul.bf16.gmra.mxu0 %v1599
        %v1610 = vpop.f32.mrf.mxu0
        %v1611 = vadd.f32 0.0, %v1610
        %v1612 = vpop.f32.mrf.mxu0
        %v1613 = vadd.f32 0.0, %v1612
        %1614 = vdwg.mxu0
        %v1615 = vpack.c.bf16 %v1586, %v1586
        %v1616 = vpack.c.bf16 %v1588, %v1588
        %v1617 = vpack.c.bf16 %v1611, %v1611
        %v1618 = vpack.c.bf16 %v1613, %v1613
        %1623 = vrot.lane.b32.xlu0 %v1615, 16
        %v1624 = vpop.permute.xlu0 %1623
        %1625 = vrot.lane.b32.xlu0 %v1616, 16
        %v1626 = vpop.permute.xlu0 %1625
        %1627 = vrot.lane.b32.xlu0 %v1617, 16
        %v1628 = vpop.permute.xlu0 %1627
        %1629 = vrot.lane.b32.xlu0 %v1618, 16
        %v1630 = vpop.permute.xlu0 %1629
        %vm1635 = vcmask 191616
        %1636 = vst.msk [vmem:[#allocation2] sm:$0xf] %vm1635, %v1624
        %1637 = vst.msk [vmem:[#allocation2 + $0x4] sm:$0xf] %vm1635, %v1626
        %1638 = vst.msk [vmem:[#allocation2 + $0x8] sm:$0xf] %vm1635, %v1628
        %1639 = vst.msk [vmem:[#allocation2 + $0xc] sm:$0xf] %vm1635, %v1630
        %1640 = vrot.lane.b32.xlu0 %v1115, 104
        %v1641 = vpop.permute.xlu0 %1640
        %1642 = vrot.lane.b32.xlu0 %v1120, 104
        %v1643 = vpop.permute.xlu0 %1642
        %v1645 = vsel %vm1121, %v1641, 0
        %v1648 = vsel %vm1121, %v1643, 0
        %1650 = vmatpush.bf16.xpose.msra.mxu0 0
        %1651 = vmatpush.bf16.xpose.msra.mxu0 0
        %1652 = vmatpush.bf16.xpose.msra.mxu0 0
        %1653 = vmatpush.bf16.xpose.msra.mxu0 0
        %1654 = vmatpush.bf16.xpose.msra.mxu0 0
        %1655 = vmatpush.bf16.xpose.msra.mxu0 0
        %1656 = vmatpush.bf16.xpose.msra.mxu0 0
        %1657 = vmatpush.bf16.xpose.msra.mxu0 %v1648
        %1658 = vmatmul.bf16.gmra.mxu0 %v1645
        %v1659 = vpop.f32.mrf.mxu0
        %v1660 = vadd.f32 0.0, %v1659
        %v1661 = vpop.f32.mrf.mxu0
        %v1662 = vadd.f32 0.0, %v1661
        %1663 = vdwg.mxu0
        %1664 = vrot.lane.b32.xlu0 %v1146, 104
        %v1665 = vpop.permute.xlu0 %1664
        %1666 = vrot.lane.b32.xlu0 %v1151, 104
        %v1667 = vpop.permute.xlu0 %1666
        %v1669 = vsel %vm1121, %v1665, 0
        %v1672 = vsel %vm1121, %v1667, 0
        %1674 = vmatpush.bf16.xpose.msra.mxu0 0
        %1675 = vmatpush.bf16.xpose.msra.mxu0 0
        %1676 = vmatpush.bf16.xpose.msra.mxu0 0
        %1677 = vmatpush.bf16.xpose.msra.mxu0 0
        %1678 = vmatpush.bf16.xpose.msra.mxu0 0
        %1679 = vmatpush.bf16.xpose.msra.mxu0 0
        %1680 = vmatpush.bf16.xpose.msra.mxu0 0
        %1681 = vmatpush.bf16.xpose.msra.mxu0 %v1672
        %1682 = vmatmul.bf16.gmra.mxu0 %v1669
        %v1683 = vpop.f32.mrf.mxu0
        %v1684 = vadd.f32 0.0, %v1683
        %v1685 = vpop.f32.mrf.mxu0
        %v1686 = vadd.f32 0.0, %v1685
        %1687 = vdwg.mxu0
        %v1688 = vmul.f32 %v1660, 0.35355338
        %v1689 = vmul.f32 %v1662, 0.35355338
        %v1690 = vmul.f32 %v1684, 0.35355338
        %v1691 = vmul.f32 %v1686, 0.35355338
        %v1692 = vsel %vm1176, %v1688, -inf
        %1693 = vmax.xlane.f32.xlu0 %v1692
        %v1694 = vpop.xlane.xlu0 %1693
        %v1695 = vsel %vm1176, %v1689, -inf
        %1696 = vmax.xlane.f32.xlu0 %v1695
        %v1697 = vpop.xlane.xlu0 %1696
        %v1698 = vsel %vm1176, %v1690, -inf
        %1699 = vmax.xlane.f32.xlu0 %v1698
        %v1700 = vpop.xlane.xlu0 %1699
        %v1701 = vsel %vm1176, %v1691, -inf
        %1702 = vmax.xlane.f32.xlu0 %v1701
        %v1703 = vpop.xlane.xlu0 %1702
        %v1704 = vsub.f32 %v1688, %v1694
        %v1705 = vsub.f32 %v1689, %v1697
        %v1706 = vsub.f32 %v1690, %v1700
        %v1707 = vsub.f32 %v1691, %v1703
        %v1708 = vmul.f32 %v1704, 1.442695
        %v1709 = vpow.pop %v1708
        %v1710 = vmul.f32 %v1705, 1.442695
        %v1711 = vpow.pop %v1710
        %v1712 = vmul.f32 %v1706, 1.442695
        %v1713 = vpow.pop %v1712
        %v1714 = vmul.f32 %v1707, 1.442695
        %v1715 = vpow.pop %v1714
        %v1716 = vsel %vm1176, %v1709, 0.0
        %1717 = vadd.xlane.f32.xlu0 %v1716
        %v1718 = vpop.xlane.xlu0 %1717
        %v1719 = vsel %vm1176, %v1711, 0.0
        %1720 = vadd.xlane.f32.xlu0 %v1719
        %v1721 = vpop.xlane.xlu0 %1720
        %v1722 = vsel %vm1176, %v1713, 0.0
        %1723 = vadd.xlane.f32.xlu0 %v1722
        %v1724 = vpop.xlane.xlu0 %1723
        %v1725 = vsel %vm1176, %v1715, 0.0
        %1726 = vadd.xlane.f32.xlu0 %v1725
        %v1727 = vpop.xlane.xlu0 %1726
        %v1728 = vrcp.pop %v1718
        %v1729 = vrcp.pop %v1721
        %v1730 = vrcp.pop %v1724
        %v1731 = vrcp.pop %v1727
        %v1732 = vmul.f32 %v1709, %v1728
        %v1733 = vmul.f32 %v1711, %v1729
        %v1734 = vmul.f32 %v1713, %v1730
        %v1735 = vmul.f32 %v1715, %v1731
        %v1736 = vpack.c.bf16 %v1732, %v1732
        %v1737 = vpack.c.bf16 %v1733, %v1733
        %v1738 = vpack.c.bf16 %v1734, %v1734
        %v1739 = vpack.c.bf16 %v1735, %v1735
        %v1742 = vunpack.c.l.b16 %v1736
        %v1743 = vunpack.c.l.b16 %v1737
        %v1744 = vpack.c.b16 %v1743, %v1742
        %1745 = vrot.lane.b32.xlu0 %v1234, 104
        %v1746 = vpop.permute.xlu0 %1745
        %v1749 = vsel %vm1176, %v1744, 0
        %1751 = vmatpush.bf16.msra.mxu0 0
        %1752 = vmatpush.bf16.msra.mxu0 0
        %1753 = vmatpush.bf16.msra.mxu0 0
        %1754 = vmatpush.bf16.msra.mxu0 0
        %1755 = vmatpush.bf16.msra.mxu0 0
        %1756 = vmatpush.bf16.msra.mxu0 0
        %1757 = vmatpush.bf16.msra.mxu0 0
        %1758 = vmatpush.bf16.msra.mxu0 %v1746
        %1759 = vmatmul.bf16.gmra.mxu0 %v1749
        %v1760 = vpop.f32.mrf.mxu0
        %v1761 = vadd.f32 0.0, %v1760
        %v1762 = vpop.f32.mrf.mxu0
        %v1763 = vadd.f32 0.0, %v1762
        %1764 = vdwg.mxu0
        %v1767 = vunpack.c.l.b16 %v1738
        %v1768 = vunpack.c.l.b16 %v1739
        %v1769 = vpack.c.b16 %v1768, %v1767
        %1770 = vrot.lane.b32.xlu0 %v1262, 104
        %v1771 = vpop.permute.xlu0 %1770
        %v1774 = vsel %vm1176, %v1769, 0
        %1776 = vmatpush.bf16.msra.mxu0 0
        %1777 = vmatpush.bf16.msra.mxu0 0
        %1778 = vmatpush.bf16.msra.mxu0 0
        %1779 = vmatpush.bf16.msra.mxu0 0
        %1780 = vmatpush.bf16.msra.mxu0 0
        %1781 = vmatpush.bf16.msra.mxu0 0
        %1782 = vmatpush.bf16.msra.mxu0 0
        %1783 = vmatpush.bf16.msra.mxu0 %v1771
        %1784 = vmatmul.bf16.gmra.mxu0 %v1774
        %v1785 = vpop.f32.mrf.mxu0
        %v1786 = vadd.f32 0.0, %v1785
        %v1787 = vpop.f32.mrf.mxu0
        %v1788 = vadd.f32 0.0, %v1787
        %1789 = vdwg.mxu0
        %v1790 = vpack.c.bf16 %v1761, %v1761
        %v1791 = vpack.c.bf16 %v1763, %v1763
        %v1792 = vpack.c.bf16 %v1786, %v1786
        %v1793 = vpack.c.bf16 %v1788, %v1788
        %1798 = vrot.lane.b32.xlu0 %v1790, 24
        %v1799 = vpop.permute.xlu0 %1798
        %1800 = vrot.lane.b32.xlu0 %v1791, 24
        %v1801 = vpop.permute.xlu0 %1800
        %1802 = vrot.lane.b32.xlu0 %v1792, 24
        %v1803 = vpop.permute.xlu0 %1802
        %1804 = vrot.lane.b32.xlu0 %v1793, 24
        %v1805 = vpop.permute.xlu0 %1804
        %vm1810 = vcmask 257216
        %1811 = vst.msk [vmem:[#allocation2] sm:$0xf] %vm1810, %v1799
        %1812 = vst.msk [vmem:[#allocation2 + $0x4] sm:$0xf] %vm1810, %v1801
        %1813 = vst.msk [vmem:[#allocation2 + $0x8] sm:$0xf] %vm1810, %v1803
        %1814 = vst.msk [vmem:[#allocation2 + $0xc] sm:$0xf] %vm1810, %v1805
        %v1815 = vld [vmem:[#allocation2] sm:$0xf]
        %v1816 = vld [vmem:[#allocation2 + $0x4] sm:$0xf]
        %v1817 = vld [vmem:[#allocation2 + $0x8] sm:$0xf]
        %v1818 = vld [vmem:[#allocation2 + $0xc] sm:$0xf]
        %v1819 = vld [vmem:[%s817] sm:$0xf]
        %v1820 = vld [vmem:[%s817 + $0x4] sm:$0xf]
        %v1821 = vld [vmem:[%s817 + $0x8] sm:$0xf]
        %v1822 = vld [vmem:[%s817 + $0xc] sm:$0xf]
        %v1827 = vunpack.c.l.b16 %v1815
        %v1828 = vunpack.c.l.b16 %v1816
        %v1829 = vunpack.c.l.b16 %v1817
        %v1830 = vunpack.c.l.b16 %v1818
        %v1831 = vpack.c.b16 %v1828, %v1827
        %v1832 = vpack.c.b16 %v1830, %v1829
        %v1837 = vunpack.c.l.b16 %v1819
        %v1838 = vunpack.c.l.b16 %v1820
        %v1839 = vunpack.c.l.b16 %v1821
        %v1840 = vunpack.c.l.b16 %v1822
        %v1841 = vpack.c.b16 %v1838, %v1837
        %v1842 = vpack.c.b16 %v1840, %v1839
        %v1846 = vsel %vm864, %v1831, 0
        %v1849 = vsel %vm864, %v1832, 0
        %1851 = vmatpush.bf16.msra.mxu0 0
        %1852 = vmatpush.bf16.msra.mxu0 0
        %1853 = vmatpush.bf16.msra.mxu0 0
        %1854 = vmatpush.bf16.msra.mxu0 0
        %1855 = vmatpush.bf16.msra.mxu0 0
        %1856 = vmatpush.bf16.msra.mxu0 0
        %1857 = vmatpush.bf16.msra.mxu0 %v1842
        %1858 = vmatpush.bf16.msra.mxu0 %v1841
        %1859 = vmatmul.bf16.gmra.mxu0 %v1846
        %v1860 = vpop.f32.mrf.mxu0
        %v1861 = vadd.f32 0.0, %v1860
        %v1862 = vpop.f32.mrf.mxu0
        %v1863 = vadd.f32 0.0, %v1862
        %1864 = vmatmul.bf16.gmra.mxu0 %v1849
        %v1865 = vpop.f32.mrf.mxu0
        %v1866 = vadd.f32 0.0, %v1865
        %v1867 = vpop.f32.mrf.mxu0
        %v1868 = vadd.f32 0.0, %v1867
        %1869 = vdwg.mxu0
        %v1870 = vadd.f32 %v858, %v1861
        %v1871 = vadd.f32 %v859, %v1863
        %v1872 = vadd.f32 %v860, %v1866
        %v1873 = vadd.f32 %v861, %v1868
        %v1874 = vld [vmem:[%s820] sm:$0x1]
        %v1876 = vperm.slane %v1874, 0
        %v1878 = vadd.f32 %v1870, %v1876
        %v1879 = vadd.f32 %v1871, %v1876
        %v1880 = vadd.f32 %v1872, %v1876
        %v1881 = vadd.f32 %v1873, %v1876
        %v1882 = vld [vmem:[%s823] sm:$0x1]
        %v1883 = vld [vmem:[%s826] sm:$0x1]
        %v1884 = vsel %vm864, %v1878, 0.0
        %1885 = vadd.xlane.f32.xlu0 %v1884
        %v1886 = vpop.xlane.xlu0 %1885
        %v1887 = vsel %vm864, %v1879, 0.0
        %1888 = vadd.xlane.f32.xlu0 %v1887
        %v1889 = vpop.xlane.xlu0 %1888
        %v1890 = vsel %vm864, %v1880, 0.0
        %1891 = vadd.xlane.f32.xlu0 %v1890
        %v1892 = vpop.xlane.xlu0 %1891
        %v1893 = vsel %vm864, %v1881, 0.0
        %1894 = vadd.xlane.f32.xlu0 %v1893
        %v1895 = vpop.xlane.xlu0 %1894
        %v1896 = vmul.f32 %v1886, %v883
        %v1897 = vmul.f32 %v1889, %v883
        %v1898 = vmul.f32 %v1892, %v883
        %v1899 = vmul.f32 %v1895, %v883
        %v1900 = vsub.f32 %v1878, %v1896
        %v1901 = vsub.f32 %v1879, %v1897
        %v1902 = vsub.f32 %v1880, %v1898
        %v1903 = vsub.f32 %v1881, %v1899
        %v1904 = vmul.f32 %v1900, %v1900
        %v1905 = vmul.f32 %v1901, %v1901
        %v1906 = vmul.f32 %v1902, %v1902
        %v1907 = vmul.f32 %v1903, %v1903
        %v1908 = vsel %vm864, %v1904, 0.0
        %1909 = vadd.xlane.f32.xlu0 %v1908
        %v1910 = vpop.xlane.xlu0 %1909
        %v1911 = vsel %vm864, %v1905, 0.0
        %1912 = vadd.xlane.f32.xlu0 %v1911
        %v1913 = vpop.xlane.xlu0 %1912
        %v1914 = vsel %vm864, %v1906, 0.0
        %1915 = vadd.xlane.f32.xlu0 %v1914
        %v1916 = vpop.xlane.xlu0 %1915
        %v1917 = vsel %vm864, %v1907, 0.0
        %1918 = vadd.xlane.f32.xlu0 %v1917
        %v1919 = vpop.xlane.xlu0 %1918
        %v1920 = vmul.f32 %v1910, %v883
        %v1921 = vmul.f32 %v1913, %v883
        %v1922 = vmul.f32 %v1916, %v883
        %v1923 = vmul.f32 %v1919, %v883
        %v1924 = vadd.f32 %v1920, 1e-06
        %v1925 = vadd.f32 %v1921, 1e-06
        %v1926 = vadd.f32 %v1922, 1e-06
        %v1927 = vadd.f32 %v1923, 1e-06
        %v1928 = vrsqrt.pop %v1924
        %v1929 = vmul.f32 %v1928, %v1924
        %v1930 = vmul.f32 %v1929, %v1928
        %v1931 = vmul.f32 0.5, %v1930
        %v1932 = vsub.f32 1.5, %v1931
        %v1933 = vmul.f32 %v1928, %v1932
        %vm1934 = vweird.f32 %v1924
        %vm1935 = vweird.f32 %v1928
        %vm1936 = vmor %vm1934, %vm1935
        %v1937 = vsel %vm1936, %v1928, %v1933
        %v1938 = vrsqrt.pop %v1925
        %v1939 = vmul.f32 %v1938, %v1925
        %v1940 = vmul.f32 %v1939, %v1938
        %v1941 = vmul.f32 0.5, %v1940
        %v1942 = vsub.f32 1.5, %v1941
        %v1943 = vmul.f32 %v1938, %v1942
        %vm1944 = vweird.f32 %v1925
        %vm1945 = vweird.f32 %v1938
        %vm1946 = vmor %vm1944, %vm1945
        %v1947 = vsel %vm1946, %v1938, %v1943
        %v1948 = vrsqrt.pop %v1926
        %v1949 = vmul.f32 %v1948, %v1926
        %v1950 = vmul.f32 %v1949, %v1948
        %v1951 = vmul.f32 0.5, %v1950
        %v1952 = vsub.f32 1.5, %v1951
        %v1953 = vmul.f32 %v1948, %v1952
        %vm1954 = vweird.f32 %v1926
        %vm1955 = vweird.f32 %v1948
        %vm1956 = vmor %vm1954, %vm1955
        %v1957 = vsel %vm1956, %v1948, %v1953
        %v1958 = vrsqrt.pop %v1927
        %v1959 = vmul.f32 %v1958, %v1927
        %v1960 = vmul.f32 %v1959, %v1958
        %v1961 = vmul.f32 0.5, %v1960
        %v1962 = vsub.f32 1.5, %v1961
        %v1963 = vmul.f32 %v1958, %v1962
        %vm1964 = vweird.f32 %v1927
        %vm1965 = vweird.f32 %v1958
        %vm1966 = vmor %vm1964, %vm1965
        %v1967 = vsel %vm1966, %v1958, %v1963
        %v1968 = vmul.f32 %v1900, %v1937
        %v1969 = vmul.f32 %v1901, %v1947
        %v1970 = vmul.f32 %v1902, %v1957
        %v1971 = vmul.f32 %v1903, %v1967
        %v1973 = vperm.slane %v1882, 0
        %v1975 = vmul.f32 %v1968, %v1973
        %v1976 = vmul.f32 %v1969, %v1973
        %v1977 = vmul.f32 %v1970, %v1973
        %v1978 = vmul.f32 %v1971, %v1973
        %v1980 = vperm.slane %v1883, 0
        %v1982 = vadd.f32 %v1975, %v1980
        %v1983 = vadd.f32 %v1976, %v1980
        %v1984 = vadd.f32 %v1977, %v1980
        %v1985 = vadd.f32 %v1978, %v1980
        %v1986 = vpack.c.bf16 %v1983, %v1982
        %v1987 = vpack.c.bf16 %v1985, %v1984
        %v1988 = vld [vmem:[%s831] sm:$0xf]
        %v1989 = vld [vmem:[%s831 + $0x4] sm:$0xf]
        %v1990 = vld [vmem:[%s831 + $0x8] sm:$0xf]
        %v1991 = vld [vmem:[%s831 + $0xc] sm:$0xf]
        %v1992 = vld [vmem:[%s834] sm:$0x1]
        %v1994 = vperm.slane %v1992, 0
        %v2000 = vunpack.c.l.b16 %v1988
        %v2001 = vunpack.c.l.b16 %v1989
        %v2002 = vunpack.c.l.b16 %v1990
        %v2003 = vunpack.c.l.b16 %v1991
        %v2004 = vpack.c.b16 %v2001, %v2000
        %v2005 = vpack.c.b16 %v2003, %v2002
        %v2009 = vsel %vm864, %v1986, 0
        %v2012 = vsel %vm864, %v1987, 0
        %2014 = vmatpush.bf16.msra.mxu0 0
        %2015 = vmatpush.bf16.msra.mxu0 0
        %2016 = vmatpush.bf16.msra.mxu0 0
        %2017 = vmatpush.bf16.msra.mxu0 0
        %2018 = vmatpush.bf16.msra.mxu0 0
        %2019 = vmatpush.bf16.msra.mxu0 0
        %2020 = vmatpush.bf16.msra.mxu0 %v2005
        %2021 = vmatpush.bf16.msra.mxu0 %v2004
        %2022 = vmatmul.bf16.gmra.mxu0 %v2009
        %v2023 = vpop.f32.mrf.mxu0
        %v2024 = vadd.f32 %v1994, %v2023
        %v2025 = vpop.f32.mrf.mxu0
        %v2026 = vadd.f32 %v1994, %v2025
        %2027 = vmatmul.bf16.gmra.mxu0 %v2012
        %v2028 = vpop.f32.mrf.mxu0
        %v2029 = vadd.f32 %v1994, %v2028
        %v2030 = vpop.f32.mrf.mxu0
        %v2031 = vadd.f32 %v1994, %v2030
        %2032 = vdwg.mxu0
        %v2033 = vmul.f32 %v2024, 0.5
        %v2034 = vmul.f32 %v2026, 0.5
        %v2035 = vmul.f32 %v2029, 0.5
        %v2036 = vmul.f32 %v2031, 0.5
        %v2037 = vmul.f32 %v2024, %v2024
        %v2038 = vmul.f32 %v2026, %v2026
        %v2039 = vmul.f32 %v2029, %v2029
        %v2040 = vmul.f32 %v2031, %v2031
        %v2041 = vmul.f32 %v2037, %v2024
        %v2042 = vmul.f32 %v2038, %v2026
        %v2043 = vmul.f32 %v2039, %v2029
        %v2044 = vmul.f32 %v2040, %v2031
        %v2045 = vmul.f32 %v2041, 0.044715
        %v2046 = vmul.f32 %v2042, 0.044715
        %v2047 = vmul.f32 %v2043, 0.044715
        %v2048 = vmul.f32 %v2044, 0.044715
        %v2049 = vadd.f32 %v2024, %v2045
        %v2050 = vadd.f32 %v2026, %v2046
        %v2051 = vadd.f32 %v2029, %v2047
        %v2052 = vadd.f32 %v2031, %v2048
        %v2053 = vmul.f32 %v2049, 0.7978846
        %v2054 = vmul.f32 %v2050, 0.7978846
        %v2055 = vmul.f32 %v2051, 0.7978846
        %v2056 = vmul.f32 %v2052, 0.7978846
        %v2057 = vtanh.pop %v2053
        %v2058 = vtanh.pop %v2054
        %v2059 = vtanh.pop %v2055
        %v2060 = vtanh.pop %v2056
        %v2061 = vadd.f32 %v2057, 1.0
        %v2062 = vadd.f32 %v2058, 1.0
        %v2063 = vadd.f32 %v2059, 1.0
        %v2064 = vadd.f32 %v2060, 1.0
        %v2065 = vmul.f32 %v2033, %v2061
        %v2066 = vmul.f32 %v2034, %v2062
        %v2067 = vmul.f32 %v2035, %v2063
        %v2068 = vmul.f32 %v2036, %v2064
        %v2069 = vpack.c.bf16 %v2066, %v2065
        %v2070 = vpack.c.bf16 %v2068, %v2067
        %v2071 = vld [vmem:[%s839] sm:$0xf]
        %v2072 = vld [vmem:[%s839 + $0x4] sm:$0xf]
        %v2073 = vld [vmem:[%s839 + $0x8] sm:$0xf]
        %v2074 = vld [vmem:[%s839 + $0xc] sm:$0xf]
        %v2075 = vld [vmem:[%s839 + $0x10] sm:$0xf]
        %v2076 = vld [vmem:[%s839 + $0x14] sm:$0xf]
        %v2077 = vld [vmem:[%s839 + $0x18] sm:$0xf]
        %v2078 = vld [vmem:[%s839 + $0x1c] sm:$0xf]
        %v2079 = vld [vmem:[%s839 + $0x20] sm:$0xf]
        %v2080 = vld [vmem:[%s839 + $0x24] sm:$0xf]
        %v2081 = vld [vmem:[%s839 + $0x28] sm:$0xf]
        %v2082 = vld [vmem:[%s839 + $0x2c] sm:$0xf]
        %v2083 = vld [vmem:[%s839 + $0x30] sm:$0xf]
        %v2084 = vld [vmem:[%s839 + $0x34] sm:$0xf]
        %v2085 = vld [vmem:[%s839 + $0x38] sm:$0xf]
        %v2086 = vld [vmem:[%s839 + $0x3c] sm:$0xf]
        %v2087 = vld [vmem:[%s842] sm:$0x1]
        %v2089 = vperm.slane %v2087, 0
        %v2107 = vunpack.c.l.b16 %v2071
        %v2108 = vunpack.c.l.b16 %v2072
        %v2109 = vunpack.c.l.b16 %v2073
        %v2110 = vunpack.c.l.b16 %v2074
        %v2111 = vunpack.c.l.b16 %v2075
        %v2112 = vunpack.c.l.b16 %v2076
        %v2113 = vunpack.c.l.b16 %v2077
        %v2114 = vunpack.c.l.b16 %v2078
        %v2115 = vunpack.c.l.b16 %v2079
        %v2116 = vunpack.c.l.b16 %v2080
        %v2117 = vunpack.c.l.b16 %v2081
        %v2118 = vunpack.c.l.b16 %v2082
        %v2119 = vunpack.c.l.b16 %v2083
        %v2120 = vunpack.c.l.b16 %v2084
        %v2121 = vunpack.c.l.b16 %v2085
        %v2122 = vunpack.c.l.b16 %v2086
        %v2123 = vpack.c.b16 %v2108, %v2107
        %v2124 = vpack.c.b16 %v2110, %v2109
        %v2125 = vpack.c.b16 %v2112, %v2111
        %v2126 = vpack.c.b16 %v2114, %v2113
        %v2127 = vpack.c.b16 %v2116, %v2115
        %v2128 = vpack.c.b16 %v2118, %v2117
        %v2129 = vpack.c.b16 %v2120, %v2119
        %v2130 = vpack.c.b16 %v2122, %v2121
        %2139 = vmatpush.bf16.msra.mxu0 %v2130
        %2140 = vmatpush.bf16.msra.mxu0 %v2129
        %2141 = vmatpush.bf16.msra.mxu0 %v2128
        %2142 = vmatpush.bf16.msra.mxu0 %v2127
        %2143 = vmatpush.bf16.msra.mxu0 %v2126
        %2144 = vmatpush.bf16.msra.mxu0 %v2125
        %2145 = vmatpush.bf16.msra.mxu0 %v2124
        %2146 = vmatpush.bf16.msra.mxu0 %v2123
        %2147 = vmatmul.bf16.gmra.mxu0 %v2069
        %v2148 = vpop.f32.mrf.mxu0
        %v2149 = vadd.f32 %v2089, %v2148
        %v2150 = vpop.f32.mrf.mxu0
        %v2151 = vadd.f32 %v2089, %v2150
        %2152 = vmatmul.bf16.gmra.mxu0 %v2070
        %v2153 = vpop.f32.mrf.mxu0
        %v2154 = vadd.f32 %v2089, %v2153
        %v2155 = vpop.f32.mrf.mxu0
        %v2156 = vadd.f32 %v2089, %v2155
        %2157 = vdwg.mxu0
        %v2158 = vadd.f32 %v1878, %v2149
        %v2159 = vadd.f32 %v1879, %v2151
        %v2160 = vadd.f32 %v1880, %v2154
        %v2161 = vadd.f32 %v1881, %v2156
        %2162 = vst.msk [vmem:[%s781] sm:$0xff] %vm864, %v2158
        %2163 = vst.msk [vmem:[%s781 + $0x8] sm:$0xff] %vm864, %v2159
        %2164 = vst.msk [vmem:[%s781 + $0x10] sm:$0xff] %vm864, %v2160
        %2165 = vst.msk [vmem:[%s781 + $0x18] sm:$0xff] %vm864, %v2161
        %s2166 = sand.u32 %s496, 1
        %s2167 = scalar_lea.sflag [#allocation5], %s2166
        %s2168 = sand.u32 %s496, 1
        %s2169 = smul.addr %s2168, 32
        %s2170 = scalar_lea.vmem [#allocation6], %s2169
        // Predicated region
        $region97: #{tpu_custom_call.1} parent=87 // pred_check
          %p2171 = pneg %p506
        $region98: #{tpu_custom_call.1} parent=87 // pred_check_branch
          %2173 = sbr.rel (%p2171) target = $region100
        $region99: #{tpu_custom_call.1} parent=87 // pred_region
          %s2174 = smul.u32 2, %s38
          %2176 = vsyncadd %s2167, 0
          %s2177 = smul.addr %s2174, 2
          %s2178 = smul.addr %s2177, 8
          %s2179 = scalar_lea.hbm %s17, %s2178
          %s2180 = sshll.u32 %s2170, 4
          %s2181 = int_to_ptr.vmem [resolvable:$true] %s2180
          %s2182 = sshll.u32 %s2179, 4
          %s2183 = int_to_ptr.hbm [resolvable:$true] %s2182
          %2188 = dma.vmem_to_hbm [thread:$0]  %s2181, 512, %s2183, %s2167, 128, 128, 8
        $region100: #{tpu_custom_call.1} parent=87 // pred_fallthru
          _
      $region88: #{tpu_custom_call.1} parent=5 // pred_fallthru
        _
      %p2189 = scmp.le.s32.totalorder 2, %s29
      // Predicated region
      $region101: #{tpu_custom_call.1} parent=5 // pred_check
        %p2190 = pneg %p2189
      $region102: #{tpu_custom_call.1} parent=5 // pred_check_branch
        %2192 = sbr.rel (%p2190) target = $region104
      $region103: #{tpu_custom_call.1} parent=5 // pred_region
        %s2193 = ssub.s32 %s29, 2
        // Predicated region
        $region105: #{tpu_custom_call.1} parent=103 // pred_check
          %p2194 = pneg %p512
        $region106: #{tpu_custom_call.1} parent=103 // pred_check_branch
          %2196 = sbr.rel (%p2194) target = $region108
        $region107: #{tpu_custom_call.1} parent=103 // pred_region
          %s2197 = sand.u32 %s497, 1
          %s2198 = scalar_lea.sflag [#allocation5], %s2197
          %s2199 = sand.u32 %s497, 1
          %s2200 = smul.addr %s2199, 32
          %s2201 = scalar_lea.vmem [#allocation6], %s2200
          %2203 = dma.done %s2198, 512
        $region108: #{tpu_custom_call.1} parent=103 // pred_fallthru
          _
      $region104: #{tpu_custom_call.1} parent=5 // pred_fallthru
        _
    $region6: #{tpu_custom_call.1} parent=1 // loop_footer
      %s33 = sadd.s32 1, %s29
    $region7: #{tpu_custom_call.1} parent=1 // loop_footer_branch
      %28 = sbr.rel target = $region3
    $region8: #{tpu_custom_call.1} parent=1 // loop_exit
      _
    %2204 = vsyncpa [#allocation4], 1
    %s2205 = scalar_lea.sflag [#allocation4], 1
    %2206 = vsyncpa %s2205, 1
    %2207 = vsyncpa [#allocation5], 1
    %s2208 = scalar_lea.sflag [#allocation5], 1
    %2209 = vsyncpa %s2208, 1

</llo_original>
